<compile_context>
chip_gen: v5e
topology: v5e:2x2
jax: 0.10.0
libtpu: 0.0.40
codegen_flags: <defaults>
</compile_context>

<pallas_src>
import functools
import math

import jax
import jax.numpy as jnp
from jax import lax
from jax.experimental import pallas as pl
from jax.experimental.pallas import tpu as pltpu


_VMEM_LIMIT = 48 * 1024 * 1024  # fits v7x (64 MiB phys) as well as v5e/v6e (128 MiB)


# ----------------------------- helpers -----------------------------

def _gelu_exact(x):
    # matches torch.nn.GELU() (exact, erf-based)
    return 0.5 * x * (1.0 + lax.erf(x * (1.0 / math.sqrt(2.0))))


def _pick_tile(dim, want, align):
    """Tile <= want; full dim if it already fits, else `want` (multiple of align).
    Ragged last blocks along independent (M / Out) axes are masked by Pallas."""
    if dim <= want:
        return dim
    assert want % align == 0
    return want


def _pick_divisor_tile(dim, want, align):
    """Largest tile <= want that divides `dim` and is a multiple of `align`,
    else the full dim (keeps contraction / kv axes un-ragged)."""
    if dim <= want:
        return dim
    t = want - (want % align)
    while t >= align:
        if dim % t == 0:
            return t
        t -= align
    return dim


# ----------------------------- fused linear kernel -----------------------------
# y = [LayerNorm](x) @ W (+ b) (+ GELU) (+ residual), f32 accumulation in VMEM.

def _linear_kernel(*refs, nk, activation, has_bias, has_residual, has_ln, ln_eps):
    it = iter(refs)
    x_ref = next(it)
    w_ref = next(it)
    ln_w_ref = next(it) if has_ln else None
    ln_b_ref = next(it) if has_ln else None
    b_ref = next(it) if has_bias else None
    r_ref = next(it) if has_residual else None
    o_ref = next(it)
    acc_ref = next(it)

    k = pl.program_id(2)

    @pl.when(k == 0)
    def _init():
        acc_ref[...] = jnp.zeros(acc_ref.shape, jnp.float32)

    x = x_ref[...]
    if has_ln:
        # LayerNorm prologue (requires the full feature row, i.e. untiled K).
        xf = x.astype(jnp.float32)
        mean = jnp.mean(xf, axis=-1, keepdims=True)
        var = jnp.mean(jnp.square(xf - mean), axis=-1, keepdims=True)
        xf = (xf - mean) * lax.rsqrt(var + ln_eps)
        xf = xf * ln_w_ref[...].astype(jnp.float32) + ln_b_ref[...].astype(jnp.float32)
        x = xf.astype(w_ref.dtype)

    acc_ref[...] += jnp.dot(x, w_ref[...], preferred_element_type=jnp.float32)

    @pl.when(k == nk - 1)
    def _finalize():
        y = acc_ref[...]
        if has_bias:
            y = y + b_ref[...].astype(jnp.float32)
        if activation == "gelu":
            y = _gelu_exact(y)
        if has_residual:
            y = y + r_ref[...].astype(jnp.float32)
        o_ref[...] = y.astype(o_ref.dtype)


def linear(x2d, w, b=None, *, activation=None, residual=None, ln=None,
           ln_eps=1e-5, out_dtype=None, tm=256, tn=512, tk=512):
    """y = [LN](x2d) @ w (+ b) (+ GELU) (+ residual).  w stored as [In, Out]."""
    N, In = x2d.shape
    In_w, Out = w.shape
    assert In_w == In
    out_dtype = out_dtype or x2d.dtype

    tm_e = _pick_tile(N, tm, 8)
    tn_e = _pick_tile(Out, tn, 128)
    if ln is not None:
        tk_e = In                      # LN prologue needs the whole row in VMEM
    else:
        tk_e = _pick_divisor_tile(In, tk, 128)
    nk = pl.cdiv(In, tk_e)
    grid = (pl.cdiv(N, tm_e), pl.cdiv(Out, tn_e), nk)

    in_specs = [pl.BlockSpec((tm_e, tk_e), lambda i, j, k: (i, k)),
                pl.BlockSpec((tk_e, tn_e), lambda i, j, k: (k, j))]
    args = [x2d, w]
    if ln is not None:
        ln_w, ln_b = ln
        in_specs += [pl.BlockSpec((1, In), lambda i, j, k: (0, 0)),
                     pl.BlockSpec((1, In), lambda i, j, k: (0, 0))]
        args += [ln_w.reshape(1, In), ln_b.reshape(1, In)]
    if b is not None:
        in_specs.append(pl.BlockSpec((1, tn_e), lambda i, j, k: (0, j)))
        args.append(b.reshape(1, Out))
    if residual is not None:
        in_specs.append(pl.BlockSpec((tm_e, tn_e), lambda i, j, k: (i, j)))
        args.append(residual)

    kern = functools.partial(
        _linear_kernel, nk=nk, activation=activation,
        has_bias=b is not None, has_residual=residual is not None,
        has_ln=ln is not None, ln_eps=ln_eps)

    return pl.pallas_call(
        kern,
        out_shape=jax.ShapeDtypeStruct((N, Out), out_dtype),
        grid=grid,
        in_specs=in_specs,
        out_specs=pl.BlockSpec((tm_e, tn_e), lambda i, j, k: (i, j)),
        scratch_shapes=[pltpu.VMEM((tm_e, tn_e), jnp.float32)],
        compiler_params=pltpu.CompilerParams(
            dimension_semantics=("parallel", "parallel", "arbitrary"),
            vmem_limit_bytes=_VMEM_LIMIT),
    )(*args)


# ----------------------------- flash causal attention -----------------------------

def _flash_attn_kernel(q_ref, k_ref, v_ref, o_ref, m_ref, l_ref, acc_ref,
                       *, scale, tq, tkv):
    qi = pl.program_id(1)
    ki = pl.program_id(2)
    nkv = pl.num_programs(2)

    @pl.when(ki == 0)
    def _init():
        m_ref[...] = jnp.full(m_ref.shape, -jnp.inf, jnp.float32)
        l_ref[...] = jnp.zeros(l_ref.shape, jnp.float32)
        acc_ref[...] = jnp.zeros(acc_ref.shape, jnp.float32)

    q_start = qi * tq
    k_start = ki * tkv

    # Causal block-skip: kv blocks strictly above the diagonal contribute nothing.
    @pl.when(k_start <= q_start + (tq - 1))
    def _compute():
        q = q_ref[0] * scale                                    # scale folded into q
        kk = k_ref[0]
        s = jnp.einsum("qd,kd->qk", q, kk,
                       preferred_element_type=jnp.float32)      # (tq, tkv)
        q_idx = q_start + lax.broadcasted_iota(jnp.int32, (tq, tkv), 0)
        k_idx = k_start + lax.broadcasted_iota(jnp.int32, (tq, tkv), 1)
        s = jnp.where(k_idx <= q_idx, s, -1e30)

        m_prev = m_ref[...]
        m_new = jnp.maximum(m_prev, jnp.max(s, axis=-1, keepdims=True))
        alpha = jnp.exp(m_prev - m_new)
        p = jnp.exp(s - m_new)
        l_ref[...] = alpha * l_ref[...] + jnp.sum(p, axis=-1, keepdims=True)
        acc_ref[...] = alpha * acc_ref[...] + jnp.dot(
            p.astype(v_ref.dtype), v_ref[0], preferred_element_type=jnp.float32)
        m_ref[...] = m_new

    @pl.when(ki == nkv - 1)
    def _finalize():
        inv_l = pl.reciprocal(l_ref[...], approx=True)
        o_ref[0] = (acc_ref[...] * inv_l).astype(o_ref.dtype)


def causal_attention(q, k, v, *, tq=256, tkv=256):
    # q, k, v: [B*H, S, Dh]
    BH, S, D = q.shape
    scale = 1.0 / math.sqrt(D)
    tq_e = _pick_divisor_tile(S, tq, 8)
    tkv_e = _pick_divisor_tile(S, tkv, 8)
    grid = (BH, S // tq_e, S // tkv_e)

    q_spec = pl.BlockSpec((1, tq_e, D), lambda b, i, j: (b, i, 0))
    kv_spec = pl.BlockSpec((1, tkv_e, D), lambda b, i, j: (b, j, 0))

    return pl.pallas_call(
        functools.partial(_flash_attn_kernel, scale=scale, tq=tq_e, tkv=tkv_e),
        out_shape=jax.ShapeDtypeStruct((BH, S, D), q.dtype),
        grid=grid,
        in_specs=[q_spec, kv_spec, kv_spec],
        out_specs=q_spec,
        scratch_shapes=[pltpu.VMEM((tq_e, 1), jnp.float32),
                        pltpu.VMEM((tq_e, 1), jnp.float32),
                        pltpu.VMEM((tq_e, D), jnp.float32)],
        compiler_params=pltpu.CompilerParams(
            dimension_semantics=("parallel", "parallel", "arbitrary"),
            vmem_limit_bytes=_VMEM_LIMIT),
    )(q, k, v)


# ----------------------------- model (params + glue) -----------------------------

def init_params(key, hp, *, dtype=jnp.bfloat16):
    E = hp["n_embd"]
    V = hp["n_vocab"]
    R = hp["rate"]
    scale = 1.0 / math.sqrt(hp["n_layer"])
    keys = iter(jax.random.split(key, 4 + 6 * hp["n_layer"]))
    wte = jax.random.normal(next(keys), (V, E), jnp.float32) * 0.02
    params = {
        "wte": wte.astype(dtype),
        # pre-transposed copy of the tied embedding for the logits matmul
        # (avoids re-materializing wte.T in HBM every forward pass).
        "wte_t": wte.T.astype(dtype),
        "wpe": (jax.random.normal(next(keys), (hp["n_ctx"], E), jnp.float32) * 0.01).astype(dtype),
        "lnf_w": jnp.ones((E,), jnp.float32),
        "lnf_b": jnp.zeros((E,), jnp.float32),
        "blocks": [],
    }
    for _ in range(hp["n_layer"]):
        blk = {
            "ln1_w": jnp.ones((E,), jnp.float32),
            "ln1_b": jnp.zeros((E,), jnp.float32),
            "ln2_w": jnp.ones((E,), jnp.float32),
            "ln2_b": jnp.zeros((E,), jnp.float32),
            # weights stored pre-transposed as [In, Out]; c_attn/c_proj scaled by 1/sqrt(n_layer)
            "attn_w": (jax.random.normal(next(keys), (E, 3 * E), jnp.float32) * 0.02 * scale).astype(dtype),
            "attn_b": jnp.zeros((3 * E,), jnp.float32),
            "proj_w": (jax.random.normal(next(keys), (E, E), jnp.float32) * 0.02 * scale).astype(dtype),
            "proj_b": jnp.zeros((E,), jnp.float32),
            "fc_w": (jax.random.normal(next(keys), (E, E * R), jnp.float32) * 0.02).astype(dtype),
            "fc_b": jax.random.normal(next(keys), (E * R,), jnp.float32) * 0.02,
            "fc2_w": (jax.random.normal(next(keys), (E * R, E), jnp.float32) * 0.02).astype(dtype),
            "fc2_b": jax.random.normal(next(keys), (E,), jnp.float32) * 0.02,
        }
        params["blocks"].append(blk)
    return params


def gpt_forward(params, X, hp):
    """Matches GPTModel.forward(X, past=None, training=True) -> logits.
    # TODO(synk): dropout (embd/attn/resid) is stochastic under torch training=True;
    # omitted here (deterministic eval-style semantics).
    # TODO(synk): AttentionLayer source not provided; 'local_window' behaviour is
    # approximated by standard dense causal self-attention.
    # TODO(synk): head split/merge stays as XLA reshape/transpose glue — a Dh-wide
    # lane block would violate the (8,128) last-dim tiling rule for Dh < 128.
    """
    B, S = X.shape
    E, H = hp["n_embd"], hp["n_head"]
    Dh = E // H
    eps = hp.get("layer_norm_epsilon", 1e-5)

    pos = jnp.arange(S)
    h = params["wte"][X] + params["wpe"][pos][None, :, :]             # (B, S, E) bf16
    h2 = h.reshape(B * S, E)

    def to_heads(t):
        return t.reshape(B, S, H, Dh).transpose(0, 2, 1, 3).reshape(B * H, S, Dh)

    for blk in params["blocks"]:
        # LN1 fused into the QKV projection.
        qkv = linear(h2, blk["attn_w"], blk["attn_b"],
                     ln=(blk["ln1_w"], blk["ln1_b"]), ln_eps=eps)     # (B*S, 3E)
        q, k, v = jnp.split(qkv, 3, axis=-1)

        a = causal_attention(to_heads(q), to_heads(k), to_heads(v))   # (B*H, S, Dh)
        a = a.reshape(B, H, S, Dh).transpose(0, 2, 1, 3).reshape(B * S, E)

        x2 = linear(a, blk["proj_w"], blk["proj_b"], residual=h2)     # x = x + c_proj(a)
        # LN2 fused into the first MLP linear (bias + exact GELU epilogue).
        m = linear(x2, blk["fc_w"], blk["fc_b"], activation="gelu",
                   ln=(blk["ln2_w"], blk["ln2_b"]), ln_eps=eps)
        h2 = linear(m, blk["fc2_w"], blk["fc2_b"], residual=x2)       # x = x + mlp(ln2)

    # Final LayerNorm fused into the tied, bias-free logits projection.
    logits = linear(h2, params["wte_t"], None,
                    ln=(params["lnf_w"], params["lnf_b"]), ln_eps=eps,
                    out_dtype=jnp.float32)                            # (B*S, n_vocab)
    return logits


# ----------------------------- main -----------------------------

if __name__ == "__main__":
    hparams = {
        "n_vocab": 256,
        "n_ctx": 16,
        "n_embd": 32,
        "n_head": 4,
        "n_layer": 2,
        "rate": 4,
        "attn_pdrop": 0.1,
        "resid_pdrop": 0.1,
        "embd_pdrop": 0.1,
        "local_window": 8,
        "layer_norm_epsilon": 1e-5,
    }
    key = jax.random.PRNGKey(0)
    pkey, xkey = jax.random.split(key)
    params = init_params(pkey, hparams)

    B, S = 2, 8
    X = jax.random.randint(xkey, (B, S), 0, hparams["n_vocab"], dtype=jnp.int32)

    fwd = jax.jit(functools.partial(gpt_forward, hp=hparams))
    logits = fwd(params, X)
    logits = jax.block_until_ready(logits)
    assert logits.shape == (B * S, hparams["n_vocab"]), logits.shape
    assert bool(jnp.all(jnp.isfinite(logits)))
    print("KERNEL_OK")
</pallas_src>

<mosaic_0001>
module attributes {stable_mosaic.version = 11 : i64} {
  func.func @_flash_attn_kernel(%arg0: i32, %arg1: i32, %arg2: i32, %arg3: memref<1x8x8xbf16, #tpu.memory_space<vmem>>, %arg4: memref<1x8x8xbf16, #tpu.memory_space<vmem>>, %arg5: memref<1x8x8xbf16, #tpu.memory_space<vmem>>, %arg6: memref<1x8x8xbf16, #tpu.memory_space<vmem>>, %arg7: memref<8x1xf32, #tpu.memory_space<vmem>>, %arg8: memref<8x1xf32, #tpu.memory_space<vmem>>, %arg9: memref<8x8xf32, #tpu.memory_space<vmem>>) attributes {dimension_semantics = [#tpu.dimension_semantics<parallel>, #tpu.dimension_semantics<parallel>, #tpu.dimension_semantics<arbitrary>], iteration_bounds = array<i64: 8, 1, 1>, scalar_prefetch = 0 : i64, scratch_operands = 3 : i64, tpu.core_type = #tpu.core_type<tc>, window_params = [{transform_indices = @transform_0, window_bounds = array<i64: 1, 8, 8>}, {transform_indices = @transform_1, window_bounds = array<i64: 1, 8, 8>}, {transform_indices = @transform_2, window_bounds = array<i64: 1, 8, 8>}, {transform_indices = @transform_3, window_bounds = array<i64: 1, 8, 8>}]} {
    %c0_i32 = arith.constant 0 : i32
    %0 = arith.cmpi eq, %arg2, %c0_i32 : i32
    %1 = arith.extui %0 : i1 to i32
    %c0_i32_0 = arith.constant 0 : i32
    %2 = arith.cmpi ne, %1, %c0_i32_0 : i32
    scf.if %2 {
      %cst = arith.constant 0xFF800000 : f32
      %12 = vector.broadcast %cst : f32 to vector<8x1xf32>
      %c0 = arith.constant 0 : index
      %c0_5 = arith.constant 0 : index
      %13 = vector.load %arg7[%c0, %c0_5] : memref<8x1xf32, #tpu.memory_space<vmem>>, vector<8x1xf32>
      tpu.vector_store %arg7[%c0, %c0_5], %12 {strides = array<i32>} : memref<8x1xf32, #tpu.memory_space<vmem>>, vector<8x1xf32>,
      %cst_6 = arith.constant 0.000000e+00 : f32
      %14 = vector.broadcast %cst_6 : f32 to vector<8x1xf32>
      %c0_7 = arith.constant 0 : index
      %c0_8 = arith.constant 0 : index
      %15 = vector.load %arg8[%c0_7, %c0_8] : memref<8x1xf32, #tpu.memory_space<vmem>>, vector<8x1xf32>
      tpu.vector_store %arg8[%c0_7, %c0_8], %14 {strides = array<i32>} : memref<8x1xf32, #tpu.memory_space<vmem>>, vector<8x1xf32>,
      %cst_9 = arith.constant 0.000000e+00 : f32
      %16 = vector.broadcast %cst_9 : f32 to vector<8x8xf32>
      %c0_10 = arith.constant 0 : index
      %c0_11 = arith.constant 0 : index
      %17 = vector.load %arg9[%c0_10, %c0_11] : memref<8x8xf32, #tpu.memory_space<vmem>>, vector<8x8xf32>
      tpu.vector_store %arg9[%c0_10, %c0_11], %16 {strides = array<i32>} : memref<8x8xf32, #tpu.memory_space<vmem>>, vector<8x8xf32>,
    } else {
    }
    %c8_i32 = arith.constant 8 : i32
    %3 = arith.muli %arg1, %c8_i32 : i32
    %c8_i32_1 = arith.constant 8 : i32
    %4 = arith.muli %arg2, %c8_i32_1 : i32
    %c7_i32 = arith.constant 7 : i32
    %5 = arith.addi %3, %c7_i32 : i32
    %6 = arith.cmpi sle, %4, %5 : i32
    %7 = arith.extui %6 : i1 to i32
    %c0_i32_2 = arith.constant 0 : i32
    %8 = arith.cmpi ne, %7, %c0_i32_2 : i32
    scf.if %8 {
      %c0 = arith.constant 0 : index
      %c0_5 = arith.constant 0 : index
      %c0_6 = arith.constant 0 : index
      %12 = vector.load %arg3[%c0, %c0_5, %c0_6] : memref<1x8x8xbf16, #tpu.memory_space<vmem>>, vector<1x8x8xbf16>
      %13 = vector.shape_cast %12 : vector<1x8x8xbf16> to vector<8x8xbf16>
      %cst = arith.constant 3.535160e-01 : bf16
      %14 = vector.broadcast %cst : bf16 to vector<8x8xbf16>
      %15 = arith.mulf %13, %14 : vector<8x8xbf16>
      %c0_7 = arith.constant 0 : index
      %c0_8 = arith.constant 0 : index
      %c0_9 = arith.constant 0 : index
      %16 = vector.load %arg4[%c0_7, %c0_8, %c0_9] : memref<1x8x8xbf16, #tpu.memory_space<vmem>>, vector<1x8x8xbf16>
      %17 = vector.shape_cast %16 : vector<1x8x8xbf16> to vector<8x8xbf16>
      "tpu.trace_start"() <{level = 10 : i32, message = "qd,kd->qk"}> : () -> ()
      %cst_10 = arith.constant dense<0.000000e+00> : vector<8x8xf32>
      %18 = tpu.matmul %15, %17, %cst_10 {dimension_numbers = #tpu.dot_dimension_numbers<[1], [1], [0], [0], [0, 0, 1, 0], [], []>} : vector<8x8xbf16>, vector<8x8xbf16>, vector<8x8xf32> -> vector<8x8xf32>
      "tpu.trace_stop"() : () -> ()
      %19 = tpu.iota {dimensions = array<i32: 0>} : vector<8x8xi32>
      %20 = vector.broadcast %3 : i32 to vector<8x8xi32>
      %21 = arith.addi %20, %19 : vector<8x8xi32>
      %22 = tpu.iota {dimensions = array<i32: 1>} : vector<8x8xi32>
      %23 = vector.broadcast %4 : i32 to vector<8x8xi32>
      %24 = arith.addi %23, %22 : vector<8x8xi32>
      %25 = arith.cmpi sle, %24, %21 : vector<8x8xi32>
      %cst_11 = arith.constant -1.000000e+30 : f32
      %26 = vector.broadcast %cst_11 : f32 to vector<8x8xf32>
      %27 = arith.select %25, %18, %26 : vector<8x8xi1>, vector<8x8xf32>
      %c0_12 = arith.constant 0 : index
      %c0_13 = arith.constant 0 : index
      %28 = vector.load %arg7[%c0_12, %c0_13] : memref<8x1xf32, #tpu.memory_space<vmem>>, vector<8x1xf32>
      %cst_14 = arith.constant dense<0xFF800000> : vector<8xf32>
      %29 = vector.multi_reduction <maximumf>, %27, %cst_14 [1] : vector<8x8xf32> to vector<8xf32>
      %30 = vector.shape_cast %29 : vector<8xf32> to vector<8x1xf32>
      %31 = arith.maximumf %28, %30 : vector<8x1xf32>
      %32 = arith.subf %28, %31 : vector<8x1xf32>
      %33 = math.exp %32 : vector<8x1xf32>
      %34 = vector.broadcast %31 : vector<8x1xf32> to vector<8x8xf32>
      %35 = arith.subf %27, %34 : vector<8x8xf32>
      %36 = math.exp %35 : vector<8x8xf32>
      %c0_15 = arith.constant 0 : index
      %c0_16 = arith.constant 0 : index
      %37 = vector.load %arg8[%c0_15, %c0_16] : memref<8x1xf32, #tpu.memory_space<vmem>>, vector<8x1xf32>
      %38 = arith.mulf %33, %37 : vector<8x1xf32>
      %cst_17 = arith.constant dense<0.000000e+00> : vector<8xf32>
      %39 = vector.multi_reduction <add>, %36, %cst_17 [1] : vector<8x8xf32> to vector<8xf32>
      %40 = vector.shape_cast %39 : vector<8xf32> to vector<8x1xf32>
      %41 = arith.addf %38, %40 : vector<8x1xf32>
      %c0_18 = arith.constant 0 : index
      %c0_19 = arith.constant 0 : index
      %42 = vector.load %arg8[%c0_18, %c0_19] : memref<8x1xf32, #tpu.memory_space<vmem>>, vector<8x1xf32>
      tpu.vector_store %arg8[%c0_18, %c0_19], %41 {strides = array<i32>} : memref<8x1xf32, #tpu.memory_space<vmem>>, vector<8x1xf32>,
      %c0_20 = arith.constant 0 : index
      %c0_21 = arith.constant 0 : index
      %43 = vector.load %arg9[%c0_20, %c0_21] : memref<8x8xf32, #tpu.memory_space<vmem>>, vector<8x8xf32>
      %44 = vector.broadcast %33 : vector<8x1xf32> to vector<8x8xf32>
      %45 = arith.mulf %44, %43 : vector<8x8xf32>
      %46 = arith.truncf %36 : vector<8x8xf32> to vector<8x8xbf16>
      %c0_22 = arith.constant 0 : index
      %c0_23 = arith.constant 0 : index
      %c0_24 = arith.constant 0 : index
      %47 = vector.load %arg5[%c0_22, %c0_23, %c0_24] : memref<1x8x8xbf16, #tpu.memory_space<vmem>>, vector<1x8x8xbf16>
      %48 = vector.shape_cast %47 : vector<1x8x8xbf16> to vector<8x8xbf16>
      %cst_25 = arith.constant dense<0.000000e+00> : vector<8x8xf32>
      %49 = tpu.matmul %46, %48, %cst_25 {dimension_numbers = #tpu.dot_dimension_numbers<[1], [0], [0], [1], [0, 0, 1, 1], [], []>} : vector<8x8xbf16>, vector<8x8xbf16>, vector<8x8xf32> -> vector<8x8xf32>
      %50 = arith.addf %45, %49 : vector<8x8xf32>
      %c0_26 = arith.constant 0 : index
      %c0_27 = arith.constant 0 : index
      %51 = vector.load %arg9[%c0_26, %c0_27] : memref<8x8xf32, #tpu.memory_space<vmem>>, vector<8x8xf32>
      tpu.vector_store %arg9[%c0_26, %c0_27], %50 {strides = array<i32>} : memref<8x8xf32, #tpu.memory_space<vmem>>, vector<8x8xf32>,
      %c0_28 = arith.constant 0 : index
      %c0_29 = arith.constant 0 : index
      %52 = vector.load %arg7[%c0_28, %c0_29] : memref<8x1xf32, #tpu.memory_space<vmem>>, vector<8x1xf32>
      tpu.vector_store %arg7[%c0_28, %c0_29], %31 {strides = array<i32>} : memref<8x1xf32, #tpu.memory_space<vmem>>, vector<8x1xf32>,
    } else {
    }
    %c0_i32_3 = arith.constant 0 : i32
    %9 = arith.cmpi eq, %arg2, %c0_i32_3 : i32
    %10 = arith.extui %9 : i1 to i32
    %c0_i32_4 = arith.constant 0 : i32
    %11 = arith.cmpi ne, %10, %c0_i32_4 : i32
    scf.if %11 {
      %c0 = arith.constant 0 : index
      %c0_5 = arith.constant 0 : index
      %12 = vector.load %arg8[%c0, %c0_5] : memref<8x1xf32, #tpu.memory_space<vmem>>, vector<8x1xf32>
      %13 = tpu.reciprocal %12 {approx = true} : vector<8x1xf32> -> vector<8x1xf32>
      %c0_6 = arith.constant 0 : index
      %c0_7 = arith.constant 0 : index
      %14 = vector.load %arg9[%c0_6, %c0_7] : memref<8x8xf32, #tpu.memory_space<vmem>>, vector<8x8xf32>
      %15 = vector.broadcast %13 : vector<8x1xf32> to vector<8x8xf32>
      %16 = arith.mulf %14, %15 : vector<8x8xf32>
      %17 = arith.truncf %16 : vector<8x8xf32> to vector<8x8xbf16>
      %c0_8 = arith.constant 0 : index
      %c0_9 = arith.constant 0 : index
      %c0_10 = arith.constant 0 : index
      %18 = vector.load %arg6[%c0_8, %c0_9, %c0_10] : memref<1x8x8xbf16, #tpu.memory_space<vmem>>, vector<1x8x8xbf16>
      %19 = vector.shape_cast %18 : vector<1x8x8xbf16> to vector<8x8xbf16>
      %20 = vector.shape_cast %17 : vector<8x8xbf16> to vector<1x8x8xbf16>
      tpu.vector_store %arg6[%c0_8, %c0_9, %c0_10], %20 {strides = array<i32>} : memref<1x8x8xbf16, #tpu.memory_space<vmem>>, vector<1x8x8xbf16>,
    } else {
    }
    return
  }
  func.func @transform_0(%arg0: i32, %arg1: i32, %arg2: i32) -> (i32, i32, i32) {
    %c0_i32 = arith.constant 0 : i32
    %c0_i32_0 = arith.constant 0 : i32
    return %arg0, %arg1, %c0_i32 : i32, i32, i32
  }
  func.func @transform_1(%arg0: i32, %arg1: i32, %arg2: i32) -> (i32, i32, i32) {
    %c0_i32 = arith.constant 0 : i32
    %c0_i32_0 = arith.constant 0 : i32
    return %arg0, %arg2, %c0_i32 : i32, i32, i32
  }
  func.func @transform_2(%arg0: i32, %arg1: i32, %arg2: i32) -> (i32, i32, i32) {
    %c0_i32 = arith.constant 0 : i32
    %c0_i32_0 = arith.constant 0 : i32
    return %arg0, %arg2, %c0_i32 : i32, i32, i32
  }
  func.func @transform_3(%arg0: i32, %arg1: i32, %arg2: i32) -> (i32, i32, i32) {
    %c0_i32 = arith.constant 0 : i32
    %c0_i32_0 = arith.constant 0 : i32
    return %arg0, %arg1, %c0_i32 : i32, i32, i32
  }
}

module attributes {stable_mosaic.version = 11 : i64} {
  func.func @_linear_kernel(%arg0: i32, %arg1: i32, %arg2: i32, %arg3: memref<16x32xbf16, #tpu.memory_space<vmem>>, %arg4: memref<32x96xbf16, #tpu.memory_space<vmem>>, %arg5: memref<1x32xf32, #tpu.memory_space<vmem>>, %arg6: memref<1x32xf32, #tpu.memory_space<vmem>>, %arg7: memref<1x96xf32, #tpu.memory_space<vmem>>, %arg8: memref<16x96xbf16, #tpu.memory_space<vmem>>, %arg9: memref<16x96xf32, #tpu.memory_space<vmem>>) attributes {dimension_semantics = [#tpu.dimension_semantics<parallel>, #tpu.dimension_semantics<parallel>, #tpu.dimension_semantics<arbitrary>], iteration_bounds = array<i64: 1, 1, 1>, scalar_prefetch = 0 : i64, scratch_operands = 1 : i64, tpu.core_type = #tpu.core_type<tc>, window_params = [{transform_indices = @transform_0, window_bounds = array<i64: 16, 32>}, {transform_indices = @transform_1, window_bounds = array<i64: 32, 96>}, {pipeline_mode = #tpu.pipeline_mode<synchronous>, transform_indices = @transform_2, window_bounds = array<i64: 1, 32>}, {pipeline_mode = #tpu.pipeline_mode<synchronous>, transform_indices = @transform_3, window_bounds = array<i64: 1, 32>}, {transform_indices = @transform_4, window_bounds = array<i64: 1, 96>}, {transform_indices = @transform_5, window_bounds = array<i64: 16, 96>}]} {
    %c0_i32 = arith.constant 0 : i32
    %0 = arith.cmpi eq, %arg2, %c0_i32 : i32
    %1 = arith.extui %0 : i1 to i32
    %c0_i32_0 = arith.constant 0 : i32
    %2 = arith.cmpi ne, %1, %c0_i32_0 : i32
    scf.if %2 {
      %cst_19 = arith.constant 0.000000e+00 : f32
      %38 = vector.broadcast %cst_19 : f32 to vector<16x96xf32>
      %c0_20 = arith.constant 0 : index
      %c0_21 = arith.constant 0 : index
      %39 = vector.load %arg9[%c0_20, %c0_21] : memref<16x96xf32, #tpu.memory_space<vmem>>, vector<16x96xf32>
      tpu.vector_store %arg9[%c0_20, %c0_21], %38 {strides = array<i32>} : memref<16x96xf32, #tpu.memory_space<vmem>>, vector<16x96xf32>,
    } else {
    }
    %c0 = arith.constant 0 : index
    %c0_1 = arith.constant 0 : index
    %3 = vector.load %arg3[%c0, %c0_1] : memref<16x32xbf16, #tpu.memory_space<vmem>>, vector<16x32xbf16>
    %4 = arith.extf %3 : vector<16x32xbf16> to vector<16x32xf32>
    %cst = arith.constant dense<0.000000e+00> : vector<16xf32>
    %5 = vector.multi_reduction <add>, %4, %cst [1] : vector<16x32xf32> to vector<16xf32>
    %6 = vector.shape_cast %5 : vector<16xf32> to vector<16x1xf32>
    %cst_2 = arith.constant 3.200000e+01 : f32
    %7 = vector.broadcast %cst_2 : f32 to vector<16x1xf32>
    %8 = arith.divf %6, %7 : vector<16x1xf32>
    %9 = vector.broadcast %8 : vector<16x1xf32> to vector<16x32xf32>
    %10 = arith.subf %4, %9 : vector<16x32xf32>
    %11 = arith.mulf %10, %10 : vector<16x32xf32>
    %cst_3 = arith.constant dense<0.000000e+00> : vector<16xf32>
    %12 = vector.multi_reduction <add>, %11, %cst_3 [1] : vector<16x32xf32> to vector<16xf32>
    %13 = vector.shape_cast %12 : vector<16xf32> to vector<16x1xf32>
    %cst_4 = arith.constant 3.200000e+01 : f32
    %14 = vector.broadcast %cst_4 : f32 to vector<16x1xf32>
    %15 = arith.divf %13, %14 : vector<16x1xf32>
    %16 = vector.broadcast %8 : vector<16x1xf32> to vector<16x32xf32>
    %17 = arith.subf %4, %16 : vector<16x32xf32>
    %cst_5 = arith.constant 9.99999974E-6 : f32
    %18 = vector.broadcast %cst_5 : f32 to vector<16x1xf32>
    %19 = arith.addf %15, %18 : vector<16x1xf32>
    %20 = math.rsqrt %19 : vector<16x1xf32>
    %21 = vector.broadcast %20 : vector<16x1xf32> to vector<16x32xf32>
    %22 = arith.mulf %17, %21 : vector<16x32xf32>
    %c0_6 = arith.constant 0 : index
    %c0_7 = arith.constant 0 : index
    %23 = vector.load %arg5[%c0_6, %c0_7] : memref<1x32xf32, #tpu.memory_space<vmem>>, vector<1x32xf32>
    %24 = vector.broadcast %23 : vector<1x32xf32> to vector<16x32xf32>
    %25 = arith.mulf %22, %24 : vector<16x32xf32>
    %c0_8 = arith.constant 0 : index
    %c0_9 = arith.constant 0 : index
    %26 = vector.load %arg6[%c0_8, %c0_9] : memref<1x32xf32, #tpu.memory_space<vmem>>, vector<1x32xf32>
    %27 = vector.broadcast %26 : vector<1x32xf32> to vector<16x32xf32>
    %28 = arith.addf %25, %27 : vector<16x32xf32>
    %29 = arith.truncf %28 : vector<16x32xf32> to vector<16x32xbf16>
    %c0_10 = arith.constant 0 : index
    %c0_11 = arith.constant 0 : index
    %30 = vector.load %arg9[%c0_10, %c0_11] : memref<16x96xf32, #tpu.memory_space<vmem>>, vector<16x96xf32>
    %c0_12 = arith.constant 0 : index
    %c0_13 = arith.constant 0 : index
    %31 = vector.load %arg4[%c0_12, %c0_13] : memref<32x96xbf16, #tpu.memory_space<vmem>>, vector<32x96xbf16>
    %cst_14 = arith.constant dense<0.000000e+00> : vector<16x96xf32>
    %32 = tpu.matmul %29, %31, %cst_14 {dimension_numbers = #tpu.dot_dimension_numbers<[1], [0], [0], [1], [0, 0, 1, 1], [], []>} : vector<16x32xbf16>, vector<32x96xbf16>, vector<16x96xf32> -> vector<16x96xf32>
    %33 = arith.addf %30, %32 : vector<16x96xf32>
    %c0_15 = arith.constant 0 : index
    %c0_16 = arith.constant 0 : index
    %34 = vector.load %arg9[%c0_15, %c0_16] : memref<16x96xf32, #tpu.memory_space<vmem>>, vector<16x96xf32>
    tpu.vector_store %arg9[%c0_15, %c0_16], %33 {strides = array<i32>} : memref<16x96xf32, #tpu.memory_space<vmem>>, vector<16x96xf32>,
    %c0_i32_17 = arith.constant 0 : i32
    %35 = arith.cmpi eq, %arg2, %c0_i32_17 : i32
    %36 = arith.extui %35 : i1 to i32
    %c0_i32_18 = arith.constant 0 : i32
    %37 = arith.cmpi ne, %36, %c0_i32_18 : i32
    scf.if %37 {
      %c0_19 = arith.constant 0 : index
      %c0_20 = arith.constant 0 : index
      %38 = vector.load %arg9[%c0_19, %c0_20] : memref<16x96xf32, #tpu.memory_space<vmem>>, vector<16x96xf32>
      %c0_21 = arith.constant 0 : index
      %c0_22 = arith.constant 0 : index
      %39 = vector.load %arg7[%c0_21, %c0_22] : memref<1x96xf32, #tpu.memory_space<vmem>>, vector<1x96xf32>
      %40 = vector.broadcast %39 : vector<1x96xf32> to vector<16x96xf32>
      %41 = arith.addf %38, %40 : vector<16x96xf32>
      %42 = arith.truncf %41 : vector<16x96xf32> to vector<16x96xbf16>
      %c0_23 = arith.constant 0 : index
      %c0_24 = arith.constant 0 : index
      %43 = vector.load %arg8[%c0_23, %c0_24] : memref<16x96xbf16, #tpu.memory_space<vmem>>, vector<16x96xbf16>
      tpu.vector_store %arg8[%c0_23, %c0_24], %42 {strides = array<i32>} : memref<16x96xbf16, #tpu.memory_space<vmem>>, vector<16x96xbf16>,
    } else {
    }
    return
  }
  func.func @transform_0(%arg0: i32, %arg1: i32, %arg2: i32) -> (i32, i32) {
    %c0_i32 = arith.constant 0 : i32
    return %arg0, %arg2 : i32, i32
  }
  func.func @transform_1(%arg0: i32, %arg1: i32, %arg2: i32) -> (i32, i32) {
    %c0_i32 = arith.constant 0 : i32
    return %arg2, %arg1 : i32, i32
  }
  func.func @transform_2(%arg0: i32, %arg1: i32, %arg2: i32) -> (i32, i32) {
    %c0_i32 = arith.constant 0 : i32
    %c0_i32_0 = arith.constant 0 : i32
    %c0_i32_1 = arith.constant 0 : i32
    return %c0_i32, %c0_i32_0 : i32, i32
  }
  func.func @transform_3(%arg0: i32, %arg1: i32, %arg2: i32) -> (i32, i32) {
    %c0_i32 = arith.constant 0 : i32
    %c0_i32_0 = arith.constant 0 : i32
    %c0_i32_1 = arith.constant 0 : i32
    return %c0_i32, %c0_i32_0 : i32, i32
  }
  func.func @transform_4(%arg0: i32, %arg1: i32, %arg2: i32) -> (i32, i32) {
    %c0_i32 = arith.constant 0 : i32
    %c0_i32_0 = arith.constant 0 : i32
    return %c0_i32, %arg1 : i32, i32
  }
  func.func @transform_5(%arg0: i32, %arg1: i32, %arg2: i32) -> (i32, i32) {
    %c0_i32 = arith.constant 0 : i32
    return %arg0, %arg1 : i32, i32
  }
}

module attributes {stable_mosaic.version = 11 : i64} {
  func.func @_linear_kernel(%arg0: i32, %arg1: i32, %arg2: i32, %arg3: memref<16x32xbf16, #tpu.memory_space<vmem>>, %arg4: memref<32x32xbf16, #tpu.memory_space<vmem>>, %arg5: memref<1x32xf32, #tpu.memory_space<vmem>>, %arg6: memref<16x32xbf16, #tpu.memory_space<vmem>>, %arg7: memref<16x32xbf16, #tpu.memory_space<vmem>>, %arg8: memref<16x32xf32, #tpu.memory_space<vmem>>) attributes {dimension_semantics = [#tpu.dimension_semantics<parallel>, #tpu.dimension_semantics<parallel>, #tpu.dimension_semantics<arbitrary>], iteration_bounds = array<i64: 1, 1, 1>, scalar_prefetch = 0 : i64, scratch_operands = 1 : i64, tpu.core_type = #tpu.core_type<tc>, window_params = [{transform_indices = @transform_0, window_bounds = array<i64: 16, 32>}, {transform_indices = @transform_1, window_bounds = array<i64: 32, 32>}, {transform_indices = @transform_2, window_bounds = array<i64: 1, 32>}, {transform_indices = @transform_3, window_bounds = array<i64: 16, 32>}, {transform_indices = @transform_4, window_bounds = array<i64: 16, 32>}]} {
    %c0_i32 = arith.constant 0 : i32
    %0 = arith.cmpi eq, %arg2, %c0_i32 : i32
    %1 = arith.extui %0 : i1 to i32
    %c0_i32_0 = arith.constant 0 : i32
    %2 = arith.cmpi ne, %1, %c0_i32_0 : i32
    scf.if %2 {
      %cst_10 = arith.constant 0.000000e+00 : f32
      %12 = vector.broadcast %cst_10 : f32 to vector<16x32xf32>
      %c0_11 = arith.constant 0 : index
      %c0_12 = arith.constant 0 : index
      %13 = vector.load %arg8[%c0_11, %c0_12] : memref<16x32xf32, #tpu.memory_space<vmem>>, vector<16x32xf32>
      tpu.vector_store %arg8[%c0_11, %c0_12], %12 {strides = array<i32>} : memref<16x32xf32, #tpu.memory_space<vmem>>, vector<16x32xf32>,
    } else {
    }
    %c0 = arith.constant 0 : index
    %c0_1 = arith.constant 0 : index
    %3 = vector.load %arg3[%c0, %c0_1] : memref<16x32xbf16, #tpu.memory_space<vmem>>, vector<16x32xbf16>
    %c0_2 = arith.constant 0 : index
    %c0_3 = arith.constant 0 : index
    %4 = vector.load %arg8[%c0_2, %c0_3] : memref<16x32xf32, #tpu.memory_space<vmem>>, vector<16x32xf32>
    %c0_4 = arith.constant 0 : index
    %c0_5 = arith.constant 0 : index
    %5 = vector.load %arg4[%c0_4, %c0_5] : memref<32x32xbf16, #tpu.memory_space<vmem>>, vector<32x32xbf16>
    %cst = arith.constant dense<0.000000e+00> : vector<16x32xf32>
    %6 = tpu.matmul %3, %5, %cst {dimension_numbers = #tpu.dot_dimension_numbers<[1], [0], [0], [1], [0, 0, 1, 1], [], []>} : vector<16x32xbf16>, vector<32x32xbf16>, vector<16x32xf32> -> vector<16x32xf32>
    %7 = arith.addf %4, %6 : vector<16x32xf32>
    %c0_6 = arith.constant 0 : index
    %c0_7 = arith.constant 0 : index
    %8 = vector.load %arg8[%c0_6, %c0_7] : memref<16x32xf32, #tpu.memory_space<vmem>>, vector<16x32xf32>
    tpu.vector_store %arg8[%c0_6, %c0_7], %7 {strides = array<i32>} : memref<16x32xf32, #tpu.memory_space<vmem>>, vector<16x32xf32>,
    %c0_i32_8 = arith.constant 0 : i32
    %9 = arith.cmpi eq, %arg2, %c0_i32_8 : i32
    %10 = arith.extui %9 : i1 to i32
    %c0_i32_9 = arith.constant 0 : i32
    %11 = arith.cmpi ne, %10, %c0_i32_9 : i32
    scf.if %11 {
      %c0_10 = arith.constant 0 : index
      %c0_11 = arith.constant 0 : index
      %12 = vector.load %arg8[%c0_10, %c0_11] : memref<16x32xf32, #tpu.memory_space<vmem>>, vector<16x32xf32>
      %c0_12 = arith.constant 0 : index
      %c0_13 = arith.constant 0 : index
      %13 = vector.load %arg5[%c0_12, %c0_13] : memref<1x32xf32, #tpu.memory_space<vmem>>, vector<1x32xf32>
      %14 = vector.broadcast %13 : vector<1x32xf32> to vector<16x32xf32>
      %15 = arith.addf %12, %14 : vector<16x32xf32>
      %c0_14 = arith.constant 0 : index
      %c0_15 = arith.constant 0 : index
      %16 = vector.load %arg6[%c0_14, %c0_15] : memref<16x32xbf16, #tpu.memory_space<vmem>>, vector<16x32xbf16>
      %17 = arith.extf %16 : vector<16x32xbf16> to vector<16x32xf32>
      %18 = arith.addf %15, %17 : vector<16x32xf32>
      %19 = arith.truncf %18 : vector<16x32xf32> to vector<16x32xbf16>
      %c0_16 = arith.constant 0 : index
      %c0_17 = arith.constant 0 : index
      %20 = vector.load %arg7[%c0_16, %c0_17] : memref<16x32xbf16, #tpu.memory_space<vmem>>, vector<16x32xbf16>
      tpu.vector_store %arg7[%c0_16, %c0_17], %19 {strides = array<i32>} : memref<16x32xbf16, #tpu.memory_space<vmem>>, vector<16x32xbf16>,
    } else {
    }
    return
  }
  func.func @transform_0(%arg0: i32, %arg1: i32, %arg2: i32) -> (i32, i32) {
    %c0_i32 = arith.constant 0 : i32
    return %arg0, %arg2 : i32, i32
  }
  func.func @transform_1(%arg0: i32, %arg1: i32, %arg2: i32) -> (i32, i32) {
    %c0_i32 = arith.constant 0 : i32
    return %arg2, %arg1 : i32, i32
  }
  func.func @transform_2(%arg0: i32, %arg1: i32, %arg2: i32) -> (i32, i32) {
    %c0_i32 = arith.constant 0 : i32
    %c0_i32_0 = arith.constant 0 : i32
    return %c0_i32, %arg1 : i32, i32
  }
  func.func @transform_3(%arg0: i32, %arg1: i32, %arg2: i32) -> (i32, i32) {
    %c0_i32 = arith.constant 0 : i32
    return %arg0, %arg1 : i32, i32
  }
  func.func @transform_4(%arg0: i32, %arg1: i32, %arg2: i32) -> (i32, i32) {
    %c0_i32 = arith.constant 0 : i32
    return %arg0, %arg1 : i32, i32
  }
}

module attributes {stable_mosaic.version = 11 : i64} {
  func.func @_linear_kernel(%arg0: i32, %arg1: i32, %arg2: i32, %arg3: memref<16x32xbf16, #tpu.memory_space<vmem>>, %arg4: memref<32x128xbf16, #tpu.memory_space<vmem>>, %arg5: memref<1x32xf32, #tpu.memory_space<vmem>>, %arg6: memref<1x32xf32, #tpu.memory_space<vmem>>, %arg7: memref<1x128xf32, #tpu.memory_space<vmem>>, %arg8: memref<16x128xbf16, #tpu.memory_space<vmem>>, %arg9: memref<16x128xf32, #tpu.memory_space<vmem>>) attributes {dimension_semantics = [#tpu.dimension_semantics<parallel>, #tpu.dimension_semantics<parallel>, #tpu.dimension_semantics<arbitrary>], iteration_bounds = array<i64: 1, 1, 1>, scalar_prefetch = 0 : i64, scratch_operands = 1 : i64, tpu.core_type = #tpu.core_type<tc>, window_params = [{transform_indices = @transform_0, window_bounds = array<i64: 16, 32>}, {transform_indices = @transform_1, window_bounds = array<i64: 32, 128>}, {pipeline_mode = #tpu.pipeline_mode<synchronous>, transform_indices = @transform_2, window_bounds = array<i64: 1, 32>}, {pipeline_mode = #tpu.pipeline_mode<synchronous>, transform_indices = @transform_3, window_bounds = array<i64: 1, 32>}, {transform_indices = @transform_4, window_bounds = array<i64: 1, 128>}, {transform_indices = @transform_5, window_bounds = array<i64: 16, 128>}]} {
    %c0_i32 = arith.constant 0 : i32
    %0 = arith.cmpi eq, %arg2, %c0_i32 : i32
    %1 = arith.extui %0 : i1 to i32
    %c0_i32_0 = arith.constant 0 : i32
    %2 = arith.cmpi ne, %1, %c0_i32_0 : i32
    scf.if %2 {
      %cst_19 = arith.constant 0.000000e+00 : f32
      %38 = vector.broadcast %cst_19 : f32 to vector<16x128xf32>
      %c0_20 = arith.constant 0 : index
      %c0_21 = arith.constant 0 : index
      %39 = vector.load %arg9[%c0_20, %c0_21] : memref<16x128xf32, #tpu.memory_space<vmem>>, vector<16x128xf32>
      tpu.vector_store %arg9[%c0_20, %c0_21], %38 {strides = array<i32>} : memref<16x128xf32, #tpu.memory_space<vmem>>, vector<16x128xf32>,
    } else {
    }
    %c0 = arith.constant 0 : index
    %c0_1 = arith.constant 0 : index
    %3 = vector.load %arg3[%c0, %c0_1] : memref<16x32xbf16, #tpu.memory_space<vmem>>, vector<16x32xbf16>
    %4 = arith.extf %3 : vector<16x32xbf16> to vector<16x32xf32>
    %cst = arith.constant dense<0.000000e+00> : vector<16xf32>
    %5 = vector.multi_reduction <add>, %4, %cst [1] : vector<16x32xf32> to vector<16xf32>
    %6 = vector.shape_cast %5 : vector<16xf32> to vector<16x1xf32>
    %cst_2 = arith.constant 3.200000e+01 : f32
    %7 = vector.broadcast %cst_2 : f32 to vector<16x1xf32>
    %8 = arith.divf %6, %7 : vector<16x1xf32>
    %9 = vector.broadcast %8 : vector<16x1xf32> to vector<16x32xf32>
    %10 = arith.subf %4, %9 : vector<16x32xf32>
    %11 = arith.mulf %10, %10 : vector<16x32xf32>
    %cst_3 = arith.constant dense<0.000000e+00> : vector<16xf32>
    %12 = vector.multi_reduction <add>, %11, %cst_3 [1] : vector<16x32xf32> to vector<16xf32>
    %13 = vector.shape_cast %12 : vector<16xf32> to vector<16x1xf32>
    %cst_4 = arith.constant 3.200000e+01 : f32
    %14 = vector.broadcast %cst_4 : f32 to vector<16x1xf32>
    %15 = arith.divf %13, %14 : vector<16x1xf32>
    %16 = vector.broadcast %8 : vector<16x1xf32> to vector<16x32xf32>
    %17 = arith.subf %4, %16 : vector<16x32xf32>
    %cst_5 = arith.constant 9.99999974E-6 : f32
    %18 = vector.broadcast %cst_5 : f32 to vector<16x1xf32>
    %19 = arith.addf %15, %18 : vector<16x1xf32>
    %20 = math.rsqrt %19 : vector<16x1xf32>
    %21 = vector.broadcast %20 : vector<16x1xf32> to vector<16x32xf32>
    %22 = arith.mulf %17, %21 : vector<16x32xf32>
    %c0_6 = arith.constant 0 : index
    %c0_7 = arith.constant 0 : index
    %23 = vector.load %arg5[%c0_6, %c0_7] : memref<1x32xf32, #tpu.memory_space<vmem>>, vector<1x32xf32>
    %24 = vector.broadcast %23 : vector<1x32xf32> to vector<16x32xf32>
    %25 = arith.mulf %22, %24 : vector<16x32xf32>
    %c0_8 = arith.constant 0 : index
    %c0_9 = arith.constant 0 : index
    %26 = vector.load %arg6[%c0_8, %c0_9] : memref<1x32xf32, #tpu.memory_space<vmem>>, vector<1x32xf32>
    %27 = vector.broadcast %26 : vector<1x32xf32> to vector<16x32xf32>
    %28 = arith.addf %25, %27 : vector<16x32xf32>
    %29 = arith.truncf %28 : vector<16x32xf32> to vector<16x32xbf16>
    %c0_10 = arith.constant 0 : index
    %c0_11 = arith.constant 0 : index
    %30 = vector.load %arg9[%c0_10, %c0_11] : memref<16x128xf32, #tpu.memory_space<vmem>>, vector<16x128xf32>
    %c0_12 = arith.constant 0 : index
    %c0_13 = arith.constant 0 : index
    %31 = vector.load %arg4[%c0_12, %c0_13] : memref<32x128xbf16, #tpu.memory_space<vmem>>, vector<32x128xbf16>
    %cst_14 = arith.constant dense<0.000000e+00> : vector<16x128xf32>
    %32 = tpu.matmul %29, %31, %cst_14 {dimension_numbers = #tpu.dot_dimension_numbers<[1], [0], [0], [1], [0, 0, 1, 1], [], []>} : vector<16x32xbf16>, vector<32x128xbf16>, vector<16x128xf32> -> vector<16x128xf32>
    %33 = arith.addf %30, %32 : vector<16x128xf32>
    %c0_15 = arith.constant 0 : index
    %c0_16 = arith.constant 0 : index
    %34 = vector.load %arg9[%c0_15, %c0_16] : memref<16x128xf32, #tpu.memory_space<vmem>>, vector<16x128xf32>
    tpu.vector_store %arg9[%c0_15, %c0_16], %33 {strides = array<i32>} : memref<16x128xf32, #tpu.memory_space<vmem>>, vector<16x128xf32>,
    %c0_i32_17 = arith.constant 0 : i32
    %35 = arith.cmpi eq, %arg2, %c0_i32_17 : i32
    %36 = arith.extui %35 : i1 to i32
    %c0_i32_18 = arith.constant 0 : i32
    %37 = arith.cmpi ne, %36, %c0_i32_18 : i32
    scf.if %37 {
      %c0_19 = arith.constant 0 : index
      %c0_20 = arith.constant 0 : index
      %38 = vector.load %arg9[%c0_19, %c0_20] : memref<16x128xf32, #tpu.memory_space<vmem>>, vector<16x128xf32>
      %c0_21 = arith.constant 0 : index
      %c0_22 = arith.constant 0 : index
      %39 = vector.load %arg7[%c0_21, %c0_22] : memref<1x128xf32, #tpu.memory_space<vmem>>, vector<1x128xf32>
      %40 = vector.broadcast %39 : vector<1x128xf32> to vector<16x128xf32>
      %41 = arith.addf %38, %40 : vector<16x128xf32>
      %cst_23 = arith.constant 5.000000e-01 : f32
      %42 = vector.broadcast %cst_23 : f32 to vector<16x128xf32>
      %43 = arith.mulf %42, %41 : vector<16x128xf32>
      %cst_24 = arith.constant 0.707106769 : f32
      %44 = vector.broadcast %cst_24 : f32 to vector<16x128xf32>
      %45 = arith.mulf %41, %44 : vector<16x128xf32>
      %46 = math.erf %45 : vector<16x128xf32>
      %cst_25 = arith.constant 1.000000e+00 : f32
      %47 = vector.broadcast %cst_25 : f32 to vector<16x128xf32>
      %48 = arith.addf %47, %46 : vector<16x128xf32>
      %49 = arith.mulf %43, %48 : vector<16x128xf32>
      %50 = arith.truncf %49 : vector<16x128xf32> to vector<16x128xbf16>
      %c0_26 = arith.constant 0 : index
      %c0_27 = arith.constant 0 : index
      %51 = vector.load %arg8[%c0_26, %c0_27] : memref<16x128xbf16, #tpu.memory_space<vmem>>, vector<16x128xbf16>
      tpu.vector_store %arg8[%c0_26, %c0_27], %50 {strides = array<i32>} : memref<16x128xbf16, #tpu.memory_space<vmem>>, vector<16x128xbf16>,
    } else {
    }
    return
  }
  func.func @transform_0(%arg0: i32, %arg1: i32, %arg2: i32) -> (i32, i32) {
    %c0_i32 = arith.constant 0 : i32
    return %arg0, %arg2 : i32, i32
  }
  func.func @transform_1(%arg0: i32, %arg1: i32, %arg2: i32) -> (i32, i32) {
    %c0_i32 = arith.constant 0 : i32
    return %arg2, %arg1 : i32, i32
  }
  func.func @transform_2(%arg0: i32, %arg1: i32, %arg2: i32) -> (i32, i32) {
    %c0_i32 = arith.constant 0 : i32
    %c0_i32_0 = arith.constant 0 : i32
    %c0_i32_1 = arith.constant 0 : i32
    return %c0_i32, %c0_i32_0 : i32, i32
  }
  func.func @transform_3(%arg0: i32, %arg1: i32, %arg2: i32) -> (i32, i32) {
    %c0_i32 = arith.constant 0 : i32
    %c0_i32_0 = arith.constant 0 : i32
    %c0_i32_1 = arith.constant 0 : i32
    return %c0_i32, %c0_i32_0 : i32, i32
  }
  func.func @transform_4(%arg0: i32, %arg1: i32, %arg2: i32) -> (i32, i32) {
    %c0_i32 = arith.constant 0 : i32
    %c0_i32_0 = arith.constant 0 : i32
    return %c0_i32, %arg1 : i32, i32
  }
  func.func @transform_5(%arg0: i32, %arg1: i32, %arg2: i32) -> (i32, i32) {
    %c0_i32 = arith.constant 0 : i32
    return %arg0, %arg1 : i32, i32
  }
}

module attributes {stable_mosaic.version = 11 : i64} {
  func.func @_linear_kernel(%arg0: i32, %arg1: i32, %arg2: i32, %arg3: memref<16x128xbf16, #tpu.memory_space<vmem>>, %arg4: memref<128x32xbf16, #tpu.memory_space<vmem>>, %arg5: memref<1x32xf32, #tpu.memory_space<vmem>>, %arg6: memref<16x32xbf16, #tpu.memory_space<vmem>>, %arg7: memref<16x32xbf16, #tpu.memory_space<vmem>>, %arg8: memref<16x32xf32, #tpu.memory_space<vmem>>) attributes {dimension_semantics = [#tpu.dimension_semantics<parallel>, #tpu.dimension_semantics<parallel>, #tpu.dimension_semantics<arbitrary>], iteration_bounds = array<i64: 1, 1, 1>, scalar_prefetch = 0 : i64, scratch_operands = 1 : i64, tpu.core_type = #tpu.core_type<tc>, window_params = [{transform_indices = @transform_0, window_bounds = array<i64: 16, 128>}, {transform_indices = @transform_1, window_bounds = array<i64: 128, 32>}, {transform_indices = @transform_2, window_bounds = array<i64: 1, 32>}, {transform_indices = @transform_3, window_bounds = array<i64: 16, 32>}, {transform_indices = @transform_4, window_bounds = array<i64: 16, 32>}]} {
    %c0_i32 = arith.constant 0 : i32
    %0 = arith.cmpi eq, %arg2, %c0_i32 : i32
    %1 = arith.extui %0 : i1 to i32
    %c0_i32_0 = arith.constant 0 : i32
    %2 = arith.cmpi ne, %1, %c0_i32_0 : i32
    scf.if %2 {
      %cst_10 = arith.constant 0.000000e+00 : f32
      %12 = vector.broadcast %cst_10 : f32 to vector<16x32xf32>
      %c0_11 = arith.constant 0 : index
      %c0_12 = arith.constant 0 : index
      %13 = vector.load %arg8[%c0_11, %c0_12] : memref<16x32xf32, #tpu.memory_space<vmem>>, vector<16x32xf32>
      tpu.vector_store %arg8[%c0_11, %c0_12], %12 {strides = array<i32>} : memref<16x32xf32, #tpu.memory_space<vmem>>, vector<16x32xf32>,
    } else {
    }
    %c0 = arith.constant 0 : index
    %c0_1 = arith.constant 0 : index
    %3 = vector.load %arg3[%c0, %c0_1] : memref<16x128xbf16, #tpu.memory_space<vmem>>, vector<16x128xbf16>
    %c0_2 = arith.constant 0 : index
    %c0_3 = arith.constant 0 : index
    %4 = vector.load %arg8[%c0_2, %c0_3] : memref<16x32xf32, #tpu.memory_space<vmem>>, vector<16x32xf32>
    %c0_4 = arith.constant 0 : index
    %c0_5 = arith.constant 0 : index
    %5 = vector.load %arg4[%c0_4, %c0_5] : memref<128x32xbf16, #tpu.memory_space<vmem>>, vector<128x32xbf16>
    %cst = arith.constant dense<0.000000e+00> : vector<16x32xf32>
    %6 = tpu.matmul %3, %5, %cst {dimension_numbers = #tpu.dot_dimension_numbers<[1], [0], [0], [1], [0, 0, 1, 1], [], []>} : vector<16x128xbf16>, vector<128x32xbf16>, vector<16x32xf32> -> vector<16x32xf32>
    %7 = arith.addf %4, %6 : vector<16x32xf32>
    %c0_6 = arith.constant 0 : index
    %c0_7 = arith.constant 0 : index
    %8 = vector.load %arg8[%c0_6, %c0_7] : memref<16x32xf32, #tpu.memory_space<vmem>>, vector<16x32xf32>
    tpu.vector_store %arg8[%c0_6, %c0_7], %7 {strides = array<i32>} : memref<16x32xf32, #tpu.memory_space<vmem>>, vector<16x32xf32>,
    %c0_i32_8 = arith.constant 0 : i32
    %9 = arith.cmpi eq, %arg2, %c0_i32_8 : i32
    %10 = arith.extui %9 : i1 to i32
    %c0_i32_9 = arith.constant 0 : i32
    %11 = arith.cmpi ne, %10, %c0_i32_9 : i32
    scf.if %11 {
      %c0_10 = arith.constant 0 : index
      %c0_11 = arith.constant 0 : index
      %12 = vector.load %arg8[%c0_10, %c0_11] : memref<16x32xf32, #tpu.memory_space<vmem>>, vector<16x32xf32>
      %c0_12 = arith.constant 0 : index
      %c0_13 = arith.constant 0 : index
      %13 = vector.load %arg5[%c0_12, %c0_13] : memref<1x32xf32, #tpu.memory_space<vmem>>, vector<1x32xf32>
      %14 = vector.broadcast %13 : vector<1x32xf32> to vector<16x32xf32>
      %15 = arith.addf %12, %14 : vector<16x32xf32>
      %c0_14 = arith.constant 0 : index
      %c0_15 = arith.constant 0 : index
      %16 = vector.load %arg6[%c0_14, %c0_15] : memref<16x32xbf16, #tpu.memory_space<vmem>>, vector<16x32xbf16>
      %17 = arith.extf %16 : vector<16x32xbf16> to vector<16x32xf32>
      %18 = arith.addf %15, %17 : vector<16x32xf32>
      %19 = arith.truncf %18 : vector<16x32xf32> to vector<16x32xbf16>
      %c0_16 = arith.constant 0 : index
      %c0_17 = arith.constant 0 : index
      %20 = vector.load %arg7[%c0_16, %c0_17] : memref<16x32xbf16, #tpu.memory_space<vmem>>, vector<16x32xbf16>
      tpu.vector_store %arg7[%c0_16, %c0_17], %19 {strides = array<i32>} : memref<16x32xbf16, #tpu.memory_space<vmem>>, vector<16x32xbf16>,
    } else {
    }
    return
  }
  func.func @transform_0(%arg0: i32, %arg1: i32, %arg2: i32) -> (i32, i32) {
    %c0_i32 = arith.constant 0 : i32
    return %arg0, %arg2 : i32, i32
  }
  func.func @transform_1(%arg0: i32, %arg1: i32, %arg2: i32) -> (i32, i32) {
    %c0_i32 = arith.constant 0 : i32
    return %arg2, %arg1 : i32, i32
  }
  func.func @transform_2(%arg0: i32, %arg1: i32, %arg2: i32) -> (i32, i32) {
    %c0_i32 = arith.constant 0 : i32
    %c0_i32_0 = arith.constant 0 : i32
    return %c0_i32, %arg1 : i32, i32
  }
  func.func @transform_3(%arg0: i32, %arg1: i32, %arg2: i32) -> (i32, i32) {
    %c0_i32 = arith.constant 0 : i32
    return %arg0, %arg1 : i32, i32
  }
  func.func @transform_4(%arg0: i32, %arg1: i32, %arg2: i32) -> (i32, i32) {
    %c0_i32 = arith.constant 0 : i32
    return %arg0, %arg1 : i32, i32
  }
}

module attributes {stable_mosaic.version = 11 : i64} {
  func.func @_linear_kernel(%arg0: i32, %arg1: i32, %arg2: i32, %arg3: memref<16x32xbf16, #tpu.memory_space<vmem>>, %arg4: memref<32x256xbf16, #tpu.memory_space<vmem>>, %arg5: memref<1x32xf32, #tpu.memory_space<vmem>>, %arg6: memref<1x32xf32, #tpu.memory_space<vmem>>, %arg7: memref<16x256xf32, #tpu.memory_space<vmem>>, %arg8: memref<16x256xf32, #tpu.memory_space<vmem>>) attributes {dimension_semantics = [#tpu.dimension_semantics<parallel>, #tpu.dimension_semantics<parallel>, #tpu.dimension_semantics<arbitrary>], iteration_bounds = array<i64: 1, 1, 1>, scalar_prefetch = 0 : i64, scratch_operands = 1 : i64, tpu.core_type = #tpu.core_type<tc>, window_params = [{transform_indices = @transform_0, window_bounds = array<i64: 16, 32>}, {transform_indices = @transform_1, window_bounds = array<i64: 32, 256>}, {pipeline_mode = #tpu.pipeline_mode<synchronous>, transform_indices = @transform_2, window_bounds = array<i64: 1, 32>}, {pipeline_mode = #tpu.pipeline_mode<synchronous>, transform_indices = @transform_3, window_bounds = array<i64: 1, 32>}, {transform_indices = @transform_4, window_bounds = array<i64: 16, 256>}]} {
    %c0_i32 = arith.constant 0 : i32
    %0 = arith.cmpi eq, %arg2, %c0_i32 : i32
    %1 = arith.extui %0 : i1 to i32
    %c0_i32_0 = arith.constant 0 : i32
    %2 = arith.cmpi ne, %1, %c0_i32_0 : i32
    scf.if %2 {
      %cst_19 = arith.constant 0.000000e+00 : f32
      %38 = vector.broadcast %cst_19 : f32 to vector<16x256xf32>
      %c0_20 = arith.constant 0 : index
      %c0_21 = arith.constant 0 : index
      %39 = vector.load %arg8[%c0_20, %c0_21] : memref<16x256xf32, #tpu.memory_space<vmem>>, vector<16x256xf32>
      tpu.vector_store %arg8[%c0_20, %c0_21], %38 {strides = array<i32>} : memref<16x256xf32, #tpu.memory_space<vmem>>, vector<16x256xf32>,
    } else {
    }
    %c0 = arith.constant 0 : index
    %c0_1 = arith.constant 0 : index
    %3 = vector.load %arg3[%c0, %c0_1] : memref<16x32xbf16, #tpu.memory_space<vmem>>, vector<16x32xbf16>
    %4 = arith.extf %3 : vector<16x32xbf16> to vector<16x32xf32>
    %cst = arith.constant dense<0.000000e+00> : vector<16xf32>
    %5 = vector.multi_reduction <add>, %4, %cst [1] : vector<16x32xf32> to vector<16xf32>
    %6 = vector.shape_cast %5 : vector<16xf32> to vector<16x1xf32>
    %cst_2 = arith.constant 3.200000e+01 : f32
    %7 = vector.broadcast %cst_2 : f32 to vector<16x1xf32>
    %8 = arith.divf %6, %7 : vector<16x1xf32>
    %9 = vector.broadcast %8 : vector<16x1xf32> to vector<16x32xf32>
    %10 = arith.subf %4, %9 : vector<16x32xf32>
    %11 = arith.mulf %10, %10 : vector<16x32xf32>
    %cst_3 = arith.constant dense<0.000000e+00> : vector<16xf32>
    %12 = vector.multi_reduction <add>, %11, %cst_3 [1] : vector<16x32xf32> to vector<16xf32>
    %13 = vector.shape_cast %12 : vector<16xf32> to vector<16x1xf32>
    %cst_4 = arith.constant 3.200000e+01 : f32
    %14 = vector.broadcast %cst_4 : f32 to vector<16x1xf32>
    %15 = arith.divf %13, %14 : vector<16x1xf32>
    %16 = vector.broadcast %8 : vector<16x1xf32> to vector<16x32xf32>
    %17 = arith.subf %4, %16 : vector<16x32xf32>
    %cst_5 = arith.constant 9.99999974E-6 : f32
    %18 = vector.broadcast %cst_5 : f32 to vector<16x1xf32>
    %19 = arith.addf %15, %18 : vector<16x1xf32>
    %20 = math.rsqrt %19 : vector<16x1xf32>
    %21 = vector.broadcast %20 : vector<16x1xf32> to vector<16x32xf32>
    %22 = arith.mulf %17, %21 : vector<16x32xf32>
    %c0_6 = arith.constant 0 : index
    %c0_7 = arith.constant 0 : index
    %23 = vector.load %arg5[%c0_6, %c0_7] : memref<1x32xf32, #tpu.memory_space<vmem>>, vector<1x32xf32>
    %24 = vector.broadcast %23 : vector<1x32xf32> to vector<16x32xf32>
    %25 = arith.mulf %22, %24 : vector<16x32xf32>
    %c0_8 = arith.constant 0 : index
    %c0_9 = arith.constant 0 : index
    %26 = vector.load %arg6[%c0_8, %c0_9] : memref<1x32xf32, #tpu.memory_space<vmem>>, vector<1x32xf32>
    %27 = vector.broadcast %26 : vector<1x32xf32> to vector<16x32xf32>
    %28 = arith.addf %25, %27 : vector<16x32xf32>
    %29 = arith.truncf %28 : vector<16x32xf32> to vector<16x32xbf16>
    %c0_10 = arith.constant 0 : index
    %c0_11 = arith.constant 0 : index
    %30 = vector.load %arg8[%c0_10, %c0_11] : memref<16x256xf32, #tpu.memory_space<vmem>>, vector<16x256xf32>
    %c0_12 = arith.constant 0 : index
    %c0_13 = arith.constant 0 : index
    %31 = vector.load %arg4[%c0_12, %c0_13] : memref<32x256xbf16, #tpu.memory_space<vmem>>, vector<32x256xbf16>
    %cst_14 = arith.constant dense<0.000000e+00> : vector<16x256xf32>
    %32 = tpu.matmul %29, %31, %cst_14 {dimension_numbers = #tpu.dot_dimension_numbers<[1], [0], [0], [1], [0, 0, 1, 1], [], []>} : vector<16x32xbf16>, vector<32x256xbf16>, vector<16x256xf32> -> vector<16x256xf32>
    %33 = arith.addf %30, %32 : vector<16x256xf32>
    %c0_15 = arith.constant 0 : index
    %c0_16 = arith.constant 0 : index
    %34 = vector.load %arg8[%c0_15, %c0_16] : memref<16x256xf32, #tpu.memory_space<vmem>>, vector<16x256xf32>
    tpu.vector_store %arg8[%c0_15, %c0_16], %33 {strides = array<i32>} : memref<16x256xf32, #tpu.memory_space<vmem>>, vector<16x256xf32>,
    %c0_i32_17 = arith.constant 0 : i32
    %35 = arith.cmpi eq, %arg2, %c0_i32_17 : i32
    %36 = arith.extui %35 : i1 to i32
    %c0_i32_18 = arith.constant 0 : i32
    %37 = arith.cmpi ne, %36, %c0_i32_18 : i32
    scf.if %37 {
      %c0_19 = arith.constant 0 : index
      %c0_20 = arith.constant 0 : index
      %38 = vector.load %arg8[%c0_19, %c0_20] : memref<16x256xf32, #tpu.memory_space<vmem>>, vector<16x256xf32>
      %c0_21 = arith.constant 0 : index
      %c0_22 = arith.constant 0 : index
      %39 = vector.load %arg7[%c0_21, %c0_22] : memref<16x256xf32, #tpu.memory_space<vmem>>, vector<16x256xf32>
      tpu.vector_store %arg7[%c0_21, %c0_22], %38 {strides = array<i32>} : memref<16x256xf32, #tpu.memory_space<vmem>>, vector<16x256xf32>,
    } else {
    }
    return
  }
  func.func @transform_0(%arg0: i32, %arg1: i32, %arg2: i32) -> (i32, i32) {
    %c0_i32 = arith.constant 0 : i32
    return %arg0, %arg2 : i32, i32
  }
  func.func @transform_1(%arg0: i32, %arg1: i32, %arg2: i32) -> (i32, i32) {
    %c0_i32 = arith.constant 0 : i32
    return %arg2, %arg1 : i32, i32
  }
  func.func @transform_2(%arg0: i32, %arg1: i32, %arg2: i32) -> (i32, i32) {
    %c0_i32 = arith.constant 0 : i32
    %c0_i32_0 = arith.constant 0 : i32
    %c0_i32_1 = arith.constant 0 : i32
    return %c0_i32, %c0_i32_0 : i32, i32
  }
  func.func @transform_3(%arg0: i32, %arg1: i32, %arg2: i32) -> (i32, i32) {
    %c0_i32 = arith.constant 0 : i32
    %c0_i32_0 = arith.constant 0 : i32
    %c0_i32_1 = arith.constant 0 : i32
    return %c0_i32, %c0_i32_0 : i32, i32
  }
  func.func @transform_4(%arg0: i32, %arg1: i32, %arg2: i32) -> (i32, i32) {
    %c0_i32 = arith.constant 0 : i32
    return %arg0, %arg1 : i32, i32
  }
}

</mosaic_0001>

<llo_original>
// kernel: gpt_forward.11
$region0: #{gpt_forward.11}
  #allocation0 [shape = 'u32[]', space=smem, size = 0x4, offset = 0x4, fixed_abs, tag = 'smem constant byte address 0x4 - core index']
  #allocation1 [shape = 'u32[72,128]{1,0:T(1,128)}', space=vmem, size = 0x9000, scoped, tag = 'internal scratch']
  #allocation2 [shape = 'f32[16,96]{1,0:T(8,128)}', space=vmem, size = 0x2000, scoped, tag = 'scratch operand']
  %s0 = inlined_call_operand.vmem [shape: bf16[16,32], index: 0, kind: input, shape index: {}]
  %s1 = inlined_call_operand.vmem [shape: bf16[32,96], index: 1, kind: input, shape index: {}]
  %s2 = inlined_call_operand.vmem [shape: f32[1,32], index: 2, kind: input, shape index: {}]
  %s3 = inlined_call_operand.vmem [shape: f32[1,32], index: 3, kind: input, shape index: {}]
  %s4 = inlined_call_operand.vmem [shape: f32[1,96], index: 4, kind: input, shape index: {}]
  %s5 = inlined_call_operand.vmem [shape: bf16[16,96], index: 5, kind: output, shape index: {}]
  %s6 = sld [smem:[#allocation0]]
  $region38: #{gpt_forward.11} parent=0
    _
  %s8 = ssub.s32 1, %s6
  %s9 = scalar_select 0, %s8, %s6
  // Predicated region
  $region2: #{gpt_forward.11} parent=0 // pred_check
    _
  $region3: #{gpt_forward.11} parent=0 // pred_check_branch
    %11 = sbr.rel (0) target = $region5
  $region4: #{gpt_forward.11} parent=0 // pred_region
    _
  $region5: #{gpt_forward.11} parent=0 // pred_fallthru
    _
  // Predicated region
  $region6: #{gpt_forward.11} parent=0 // pred_check
    _
  $region7: #{gpt_forward.11} parent=0 // pred_check_branch
    %13 = sbr.rel (0) target = $region9
  $region8: #{gpt_forward.11} parent=0 // pred_region
    _
  $region9: #{gpt_forward.11} parent=0 // pred_fallthru
    _
  // Predicated region
  $region10: #{gpt_forward.11} parent=0 // pred_check
    _
  $region11: #{gpt_forward.11} parent=0 // pred_check_branch
    %15 = sbr.rel (0) target = $region13
  $region12: #{gpt_forward.11} parent=0 // pred_region
    _
  $region13: #{gpt_forward.11} parent=0 // pred_fallthru
    _
  // Predicated region
  $region14: #{gpt_forward.11} parent=0 // pred_check
    _
  $region15: #{gpt_forward.11} parent=0 // pred_check_branch
    %17 = sbr.rel (0) target = $region17
  $region16: #{gpt_forward.11} parent=0 // pred_region
    _
  $region17: #{gpt_forward.11} parent=0 // pred_fallthru
    _
  // Predicated region
  $region18: #{gpt_forward.11} parent=0 // pred_check
    _
  $region19: #{gpt_forward.11} parent=0 // pred_check_branch
    %19 = sbr.rel (0) target = $region21
  $region20: #{gpt_forward.11} parent=0 // pred_region
    _
  $region21: #{gpt_forward.11} parent=0 // pred_fallthru
    _
  %p21 = scmp.eq.s32.totalorder 0, 0
  // Predicated region
  $region22: #{gpt_forward.11} parent=0 // pred_check
    %p22 = pneg %p21
  $region23: #{gpt_forward.11} parent=0 // pred_check_branch
    %24 = sbr.rel (%p22) target = $region25
  $region24: #{gpt_forward.11} parent=0 // pred_region
    %vm25 = vcmask 785408
    %26 = vst.msk [vmem:[#allocation2] sm:$0xff] %vm25, 0.0
    %27 = vst.msk [vmem:[#allocation2 + $0x8] sm:$0xff] %vm25, 0.0
  $region25: #{gpt_forward.11} parent=0 // pred_fallthru
    _
  %v28 = vld [vmem:[%s0] sm:$0xf]
  %v29 = vld [vmem:[%s0 + $0x4] sm:$0xf]
  %v30 = vunpack.c.l.bf16 %v28
  %v31 = vunpack.c.l.bf16 %v29
  %vm32 = vcmask 261120
  %v33 = vsel %vm32, %v30, 0.0
  %34 = vadd.xlane.f32.xlu0 %v33
  %v35 = vpop.xlane.xlu0 %34
  %v36 = vsel %vm32, %v31, 0.0
  %37 = vadd.xlane.f32.xlu0 %v36
  %v38 = vpop.xlane.xlu0 %37
  %v39 = vrcp.pop 32.0
  %v40 = vmul.f32 32.0, %v39
  %v41 = vsub.f32 1.0, %v40
  %v42 = vmul.f32 %v39, %v41
  %v43 = vadd.f32 %v39, %v42
  %vm44 = vweird.f32 %v39
  %v45 = vsel %vm44, %v39, %v43
  %v46 = vmul.f32 %v35, %v45
  %v47 = vmul.f32 %v38, %v45
  %v48 = vsub.f32 %v30, %v46
  %v49 = vsub.f32 %v31, %v47
  %v50 = vmul.f32 %v48, %v48
  %v51 = vmul.f32 %v49, %v49
  %v52 = vsel %vm32, %v50, 0.0
  %53 = vadd.xlane.f32.xlu0 %v52
  %v54 = vpop.xlane.xlu0 %53
  %v55 = vsel %vm32, %v51, 0.0
  %56 = vadd.xlane.f32.xlu0 %v55
  %v57 = vpop.xlane.xlu0 %56
  %v58 = vmul.f32 %v54, %v45
  %v59 = vmul.f32 %v57, %v45
  %v60 = vadd.f32 %v58, 1e-05
  %v61 = vadd.f32 %v59, 1e-05
  %v62 = vrsqrt.pop %v60
  %v63 = vmul.f32 %v62, %v60
  %v64 = vmul.f32 %v63, %v62
  %v65 = vmul.f32 0.5, %v64
  %v66 = vsub.f32 1.5, %v65
  %v67 = vmul.f32 %v62, %v66
  %vm68 = vweird.f32 %v60
  %vm69 = vweird.f32 %v62
  %vm70 = vmor %vm68, %vm69
  %v71 = vsel %vm70, %v62, %v67
  %v72 = vrsqrt.pop %v61
  %v73 = vmul.f32 %v72, %v61
  %v74 = vmul.f32 %v73, %v72
  %v75 = vmul.f32 0.5, %v74
  %v76 = vsub.f32 1.5, %v75
  %v77 = vmul.f32 %v72, %v76
  %vm78 = vweird.f32 %v61
  %vm79 = vweird.f32 %v72
  %vm80 = vmor %vm78, %vm79
  %v81 = vsel %vm80, %v72, %v77
  %v82 = vmul.f32 %v48, %v71
  %v83 = vmul.f32 %v49, %v81
  %v84 = vld [vmem:[%s2] sm:$0x1]
  %v86 = vperm.slane %v84, 0
  %v88 = vmul.f32 %v82, %v86
  %v89 = vmul.f32 %v83, %v86
  %v90 = vld [vmem:[%s3] sm:$0x1]
  %v92 = vperm.slane %v90, 0
  %v94 = vadd.f32 %v88, %v92
  %v95 = vadd.f32 %v89, %v92
  %v96 = vpack.c.bf16 %v95, %v94
  %v97 = vld [vmem:[#allocation2] sm:$0xff]
  %v98 = vld [vmem:[#allocation2 + $0x8] sm:$0xff]
  %v99 = vld [vmem:[%s1] sm:$0xf]
  %v100 = vld [vmem:[%s1 + $0x4] sm:$0xf]
  %v101 = vld [vmem:[%s1 + $0x8] sm:$0xf]
  %v102 = vld [vmem:[%s1 + $0xc] sm:$0xf]
  %v107 = vunpack.c.l.b16 %v99
  %v108 = vunpack.c.l.b16 %v100
  %v109 = vunpack.c.l.b16 %v101
  %v110 = vunpack.c.l.b16 %v102
  %v111 = vpack.c.b16 %v108, %v107
  %v112 = vpack.c.b16 %v110, %v109
  %v116 = vsel %vm32, %v96, 0
  %118 = vmatpush.bf16.msra.mxu0 0
  %119 = vmatpush.bf16.msra.mxu0 0
  %120 = vmatpush.bf16.msra.mxu0 0
  %121 = vmatpush.bf16.msra.mxu0 0
  %122 = vmatpush.bf16.msra.mxu0 0
  %123 = vmatpush.bf16.msra.mxu0 0
  %124 = vmatpush.bf16.msra.mxu0 %v112
  %125 = vmatpush.bf16.msra.mxu0 %v111
  %126 = vmatmul.bf16.gmra.mxu0 %v116
  %v127 = vpop.f32.mrf.mxu0
  %v128 = vadd.f32 0.0, %v127
  %v129 = vpop.f32.mrf.mxu0
  %v130 = vadd.f32 0.0, %v129
  %131 = vdwg.mxu0
  %v132 = vadd.f32 %v97, %v128
  %v133 = vadd.f32 %v98, %v130
  %vm134 = vcmask 785408
  %135 = vst.msk [vmem:[#allocation2] sm:$0xff] %vm134, %v132
  %136 = vst.msk [vmem:[#allocation2 + $0x8] sm:$0xff] %vm134, %v133
  // Predicated region
  $region26: #{gpt_forward.11} parent=0 // pred_check
    %p137 = pneg %p21
  $region27: #{gpt_forward.11} parent=0 // pred_check_branch
    %139 = sbr.rel (%p137) target = $region29
  $region28: #{gpt_forward.11} parent=0 // pred_region
    %v140 = vld [vmem:[#allocation2] sm:$0xff]
    %v141 = vld [vmem:[#allocation2 + $0x8] sm:$0xff]
    %v142 = vld [vmem:[%s4] sm:$0x1]
    %v144 = vperm.slane %v142, 0
    %v146 = vadd.f32 %v140, %v144
    %v147 = vadd.f32 %v141, %v144
    %v148 = vpack.c.bf16 %v146, %v146
    %v149 = vpack.c.bf16 %v147, %v147
    %vm150 = vcmask 781312
    %151 = vst.msk [vmem:[%s5] sm:$0xf] %vm150, %v148
    %152 = vst.msk [vmem:[%s5 + $0x4] sm:$0xf] %vm150, %v149
  $region29: #{gpt_forward.11} parent=0 // pred_fallthru
    _
  // Predicated region
  $region30: #{gpt_forward.11} parent=0 // pred_check
    _
  $region31: #{gpt_forward.11} parent=0 // pred_check_branch
    %154 = sbr.rel (0) target = $region33
  $region32: #{gpt_forward.11} parent=0 // pred_region
    _
  $region33: #{gpt_forward.11} parent=0 // pred_fallthru
    _
  // Predicated region
  $region34: #{gpt_forward.11} parent=0 // pred_check
    _
  $region35: #{gpt_forward.11} parent=0 // pred_check_branch
    %156 = sbr.rel (0) target = $region37
  $region36: #{gpt_forward.11} parent=0 // pred_region
    _
  $region37: #{gpt_forward.11} parent=0 // pred_fallthru
    _

// kernel: gpt_forward.12
$region0: #{gpt_forward.12}
  #allocation0 [shape = 'u32[]', space=smem, size = 0x4, offset = 0x4, fixed_abs, tag = 'smem constant byte address 0x4 - core index']
  #allocation1 [shape = 'u32[72,128]{1,0:T(1,128)}', space=vmem, size = 0x9000, scoped, tag = 'internal scratch']
  #allocation2 [shape = 'f32[8,1]{1,0:T(8,128)}', space=vmem, size = 0x1000, scoped, tag = 'scratch operand']
  #allocation3 [shape = 'f32[8,1]{1,0:T(8,128)}', space=vmem, size = 0x1000, scoped, tag = 'scratch operand']
  #allocation4 [shape = 'f32[8,8]{1,0:T(8,128)}', space=vmem, size = 0x1000, scoped, tag = 'scratch operand']
  %s0 = inlined_call_operand.vmem [shape: bf16[8,8,8], index: 0, kind: input, shape index: {}]
  %s1 = inlined_call_operand.vmem [shape: bf16[8,8,8], index: 1, kind: input, shape index: {}]
  %s2 = inlined_call_operand.vmem [shape: bf16[8,8,8], index: 2, kind: input, shape index: {}]
  %s3 = inlined_call_operand.vmem [shape: bf16[8,8,8], index: 3, kind: output, shape index: {}]
  %s4 = sld [smem:[#allocation0]]
  $region57: #{gpt_forward.12} parent=0
    _
  %s6 = ssub.s32 1, %s4
  %s7 = scalar_select 0, %s6, %s4
  loop: start=0, step=1, limit=10
  $region2: #{gpt_forward.12} parent=0 // loop_pre_header
    _
  $region3: #{gpt_forward.12} parent=0 // loop_header
    %s9 = sphi 0, %s13
    %p10 = scmp.ge.s32.totalorder %s9, 10
    %s16 = sphi 0, %s35
    %s17 = sphi 0, %s31
    %s18 = sphi 0, %s27
    %s19 = sphi 0, %s16
    %s20 = sphi 0, %s17
    %s21 = sphi 0, %s18
    %s22 = sphi 0, %s19
    %s23 = sphi 0, %s20
    %s24 = sphi 0, %s21
    %s40 = sphi 0, %s42
    %s43 = sphi 0, %s40
    %s44 = sphi 0, %s43
    %s60 = sphi 0, %s44
    %s68 = sphi 0, %s70
    %s71 = sphi 0, %s68
    %s72 = sphi 0, %s71
    %s88 = sphi 0, %s72
    %s96 = sphi 0, %s98
    %s99 = sphi 0, %s96
    %s100 = sphi 0, %s99
    %s116 = sphi 0, %s100
    %s124 = sphi 0, %s126
    %s127 = sphi 0, %s124
    %s128 = sphi 0, %s127
    %s144 = sphi 0, %s128
  $region4: #{gpt_forward.12} parent=0 // loop_header_branch
    %12 = sbr.rel (%p10) target = $region8
  $region5: #{gpt_forward.12} parent=0 // loop_body
    %s14 = ssub.s32 %s9, 1
    %s15 = ssub.s32 %s9, 2
    %s25 = sadd.s32 1, %s18
    %p26 = scmp.ge.s32.totalorder %s25, 1
    %s27 = scalar_select %p26, 0, %s25
    %s28 = sadd.s32 1, %s17
    %s29 = scalar_select %p26, %s28, %s17
    %p30 = scmp.ge.s32.totalorder %s29, 1
    %s31 = scalar_select %p30, 0, %s29
    %s32 = sadd.s32 1, %s16
    %s33 = scalar_select %p30, %s32, %s16
    %p34 = scmp.ge.s32.totalorder %s33, 8
    %s35 = scalar_select %p34, 0, %s33
    %s36 = ssub.s32 %s16, %s35
    %s37 = ssub.s32 %s17, %s31
    %s38 = sor.u32 %s36, %s37
    %p39 = scmp.eq.s32.totalorder %s38, 0
    %s41 = sadd.s32 %s40, 1
    %s42 = scalar_select %p39, %s40, %s41
    %p45 = pneg %p39
    %p46 = scmp.eq.s32.totalorder %s9, 7
    %p47 = por %p45, %p46
    %p48 = scmp.ne.s32.totalorder %s40, %s43
    %p49 = scmp.eq.s32.totalorder %s9, 0
    %p50 = por %p48, %p49
    %p51 = scmp.ne.s32.totalorder %s40, %s43
    %p52 = scmp.eq.s32.totalorder %s14, 7
    %p53 = por %p51, %p52
    %p54 = scmp.ne.s32.totalorder %s43, %s44
    %p55 = scmp.eq.s32.totalorder %s14, 0
    %p56 = por %p54, %p55
    %p57 = scmp.ne.s32.totalorder %s43, %s44
    %p58 = scmp.eq.s32.totalorder %s15, 7
    %p59 = por %p57, %p58
    %p61 = scmp.ne.s32.totalorder %s44, %s60
    %p62 = scmp.eq.s32.totalorder %s15, 0
    %p63 = por %p61, %p62
    %s64 = ssub.s32 %s16, %s35
    %s65 = ssub.s32 %s18, %s27
    %s66 = sor.u32 %s64, %s65
    %p67 = scmp.eq.s32.totalorder %s66, 0
    %s69 = sadd.s32 %s68, 1
    %s70 = scalar_select %p67, %s68, %s69
    %p73 = pneg %p67
    %p74 = scmp.eq.s32.totalorder %s9, 7
    %p75 = por %p73, %p74
    %p76 = scmp.ne.s32.totalorder %s68, %s71
    %p77 = scmp.eq.s32.totalorder %s9, 0
    %p78 = por %p76, %p77
    %p79 = scmp.ne.s32.totalorder %s68, %s71
    %p80 = scmp.eq.s32.totalorder %s14, 7
    %p81 = por %p79, %p80
    %p82 = scmp.ne.s32.totalorder %s71, %s72
    %p83 = scmp.eq.s32.totalorder %s14, 0
    %p84 = por %p82, %p83
    %p85 = scmp.ne.s32.totalorder %s71, %s72
    %p86 = scmp.eq.s32.totalorder %s15, 7
    %p87 = por %p85, %p86
    %p89 = scmp.ne.s32.totalorder %s72, %s88
    %p90 = scmp.eq.s32.totalorder %s15, 0
    %p91 = por %p89, %p90
    %s92 = ssub.s32 %s16, %s35
    %s93 = ssub.s32 %s18, %s27
    %s94 = sor.u32 %s92, %s93
    %p95 = scmp.eq.s32.totalorder %s94, 0
    %s97 = sadd.s32 %s96, 1
    %s98 = scalar_select %p95, %s96, %s97
    %p101 = pneg %p95
    %p102 = scmp.eq.s32.totalorder %s9, 7
    %p103 = por %p101, %p102
    %p104 = scmp.ne.s32.totalorder %s96, %s99
    %p105 = scmp.eq.s32.totalorder %s9, 0
    %p106 = por %p104, %p105
    %p107 = scmp.ne.s32.totalorder %s96, %s99
    %p108 = scmp.eq.s32.totalorder %s14, 7
    %p109 = por %p107, %p108
    %p110 = scmp.ne.s32.totalorder %s99, %s100
    %p111 = scmp.eq.s32.totalorder %s14, 0
    %p112 = por %p110, %p111
    %p113 = scmp.ne.s32.totalorder %s99, %s100
    %p114 = scmp.eq.s32.totalorder %s15, 7
    %p115 = por %p113, %p114
    %p117 = scmp.ne.s32.totalorder %s100, %s116
    %p118 = scmp.eq.s32.totalorder %s15, 0
    %p119 = por %p117, %p118
    %s120 = ssub.s32 %s16, %s35
    %s121 = ssub.s32 %s17, %s31
    %s122 = sor.u32 %s120, %s121
    %p123 = scmp.eq.s32.totalorder %s122, 0
    %s125 = sadd.s32 %s124, 1
    %s126 = scalar_select %p123, %s124, %s125
    %p129 = pneg %p123
    %p130 = scmp.eq.s32.totalorder %s9, 7
    %p131 = por %p129, %p130
    %p132 = scmp.ne.s32.totalorder %s124, %s127
    %p133 = scmp.eq.s32.totalorder %s9, 0
    %p134 = por %p132, %p133
    %p135 = scmp.ne.s32.totalorder %s124, %s127
    %p136 = scmp.eq.s32.totalorder %s14, 7
    %p137 = por %p135, %p136
    %p138 = scmp.ne.s32.totalorder %s127, %s128
    %p139 = scmp.eq.s32.totalorder %s14, 0
    %p140 = por %p138, %p139
    %p141 = scmp.ne.s32.totalorder %s127, %s128
    %p142 = scmp.eq.s32.totalorder %s15, 7
    %p143 = por %p141, %p142
    %p145 = scmp.ne.s32.totalorder %s128, %s144
    %p146 = scmp.eq.s32.totalorder %s15, 0
    %p147 = por %p145, %p146
    %p148 = scmp.le.s32.totalorder 1, %s9
    %p149 = scmp.lt.s32.totalorder %s9, 9
    %p150 = pnand %p148, %p149
    %p151 = pneg %p150
    // Predicated region
    $region9: #{gpt_forward.12} parent=5 // pred_check
      _
    $region10: #{gpt_forward.12} parent=5 // pred_check_branch
      %153 = sbr.rel (%p150) target = $region12
    $region11: #{gpt_forward.12} parent=5 // pred_region
      %s154 = ssub.s32 %s9, 1
    $region12: #{gpt_forward.12} parent=5 // pred_fallthru
      _
    %p155 = scmp.lt.s32.totalorder %s9, 8
    // Predicated region
    $region13: #{gpt_forward.12} parent=5 // pred_check
      %p156 = pneg %p155
    $region14: #{gpt_forward.12} parent=5 // pred_check_branch
      %158 = sbr.rel (%p156) target = $region16
    $region15: #{gpt_forward.12} parent=5 // pred_region
      // Predicated region
      $region17: #{gpt_forward.12} parent=15 // pred_check
        %p159 = pneg %p50
      $region18: #{gpt_forward.12} parent=15 // pred_check_branch
        %161 = sbr.rel (%p159) target = $region20
      $region19: #{gpt_forward.12} parent=15 // pred_region
        %p162 = scmp.lt.s32.totalorder %s16, 7
        %s163 = scalar_select %p162, %s16, 7
        %p164 = scmp.lt.s32.totalorder %s17, 0
        %s165 = scalar_select %p164, %s17, 0
        %s166 = sadd.s32 %s165, %s163
        %s167 = smul.addr %s166, 4
        %s168 = scalar_lea.vmem %s0, %s167
      $region20: #{gpt_forward.12} parent=15 // pred_fallthru
        _
      // Predicated region
      $region21: #{gpt_forward.12} parent=15 // pred_check
        %p169 = pneg %p78
      $region22: #{gpt_forward.12} parent=15 // pred_check_branch
        %171 = sbr.rel (%p169) target = $region24
      $region23: #{gpt_forward.12} parent=15 // pred_region
        %p172 = scmp.lt.s32.totalorder %s16, 7
        %s173 = scalar_select %p172, %s16, 7
        %p174 = scmp.lt.s32.totalorder %s18, 0
        %s175 = scalar_select %p174, %s18, 0
        %s176 = sadd.s32 %s175, %s173
        %s177 = smul.addr %s176, 4
        %s178 = scalar_lea.vmem %s1, %s177
      $region24: #{gpt_forward.12} parent=15 // pred_fallthru
        _
      // Predicated region
      $region25: #{gpt_forward.12} parent=15 // pred_check
        %p179 = pneg %p106
      $region26: #{gpt_forward.12} parent=15 // pred_check_branch
        %181 = sbr.rel (%p179) target = $region28
      $region27: #{gpt_forward.12} parent=15 // pred_region
        %p182 = scmp.lt.s32.totalorder %s16, 7
        %s183 = scalar_select %p182, %s16, 7
        %p184 = scmp.lt.s32.totalorder %s18, 0
        %s185 = scalar_select %p184, %s18, 0
        %s186 = sadd.s32 %s185, %s183
        %s187 = smul.addr %s186, 4
        %s188 = scalar_lea.vmem %s2, %s187
      $region28: #{gpt_forward.12} parent=15 // pred_fallthru
        _
    $region16: #{gpt_forward.12} parent=5 // pred_fallthru
      _
    %p189 = scmp.le.s32.totalorder 1, %s9
    %p190 = scmp.lt.s32.totalorder %s9, 9
    %p191 = pnand %p189, %p190
    %p192 = pneg %p191
    // Predicated region
    $region29: #{gpt_forward.12} parent=5 // pred_check
      _
    $region30: #{gpt_forward.12} parent=5 // pred_check_branch
      %194 = sbr.rel (%p191) target = $region32
    $region31: #{gpt_forward.12} parent=5 // pred_region
      %s195 = ssub.s32 %s9, 1
      %p196 = scmp.lt.s32.totalorder %s19, 7
      %s197 = scalar_select %p196, %s19, 7
      %p198 = scmp.lt.s32.totalorder %s20, 0
      %s199 = scalar_select %p198, %s20, 0
      %s200 = sadd.s32 %s199, %s197
      %s201 = smul.addr %s200, 4
      %s202 = scalar_lea.vmem %s0, %s201
      %p203 = pneg %p56
      %p204 = pneg %p53
      %p205 = scmp.lt.s32.totalorder %s19, 7
      %s206 = scalar_select %p205, %s19, 7
      %p207 = scmp.lt.s32.totalorder %s21, 0
      %s208 = scalar_select %p207, %s21, 0
      %s209 = sadd.s32 %s208, %s206
      %s210 = smul.addr %s209, 4
      %s211 = scalar_lea.vmem %s1, %s210
      %p212 = pneg %p84
      %p213 = pneg %p81
      %p214 = scmp.lt.s32.totalorder %s19, 7
      %s215 = scalar_select %p214, %s19, 7
      %p216 = scmp.lt.s32.totalorder %s21, 0
      %s217 = scalar_select %p216, %s21, 0
      %s218 = sadd.s32 %s217, %s215
      %s219 = smul.addr %s218, 4
      %s220 = scalar_lea.vmem %s2, %s219
      %p221 = pneg %p112
      %p222 = pneg %p109
      %p223 = pneg %p140
      %p224 = pneg %p137
      %p225 = scmp.lt.s32.totalorder %s19, 7
      %s226 = scalar_select %p225, %s19, 7
      %p227 = scmp.lt.s32.totalorder %s20, 0
      %s228 = scalar_select %p227, %s20, 0
      %s229 = sadd.s32 %s228, %s226
      %s230 = smul.addr %s229, 4
      %s231 = scalar_lea.vmem %s3, %s230
      %p232 = scmp.lt.s32.totalorder %s19, 7
      %s233 = scalar_select %p232, %s19, 7
      %p234 = scmp.lt.s32.totalorder %s20, 0
      %s235 = scalar_select %p234, %s20, 0
      %s236 = sadd.s32 %s235, %s233
      %s237 = smul.addr %s236, 4
      %s238 = scalar_lea.vmem %s0, %s237
      %p239 = scmp.lt.s32.totalorder %s19, 7
      %s240 = scalar_select %p239, %s19, 7
      %p241 = scmp.lt.s32.totalorder %s21, 0
      %s242 = scalar_select %p241, %s21, 0
      %s243 = sadd.s32 %s242, %s240
      %s244 = smul.addr %s243, 4
      %s245 = scalar_lea.vmem %s1, %s244
      %p246 = scmp.lt.s32.totalorder %s19, 7
      %s247 = scalar_select %p246, %s19, 7
      %p248 = scmp.lt.s32.totalorder %s21, 0
      %s249 = scalar_select %p248, %s21, 0
      %s250 = sadd.s32 %s249, %s247
      %s251 = smul.addr %s250, 4
      %s252 = scalar_lea.vmem %s2, %s251
      %p253 = scmp.lt.s32.totalorder %s19, 7
      %s254 = scalar_select %p253, %s19, 7
      %p255 = scmp.lt.s32.totalorder %s20, 0
      %s256 = scalar_select %p255, %s20, 0
      %s257 = sadd.s32 %s256, %s254
      %s258 = smul.addr %s257, 4
      %s259 = scalar_lea.vmem %s3, %s258
      %p261 = scmp.eq.s32.totalorder %s21, 0
      // Predicated region
      $region33: #{gpt_forward.12} parent=31 // pred_check
        %p262 = pneg %p261
      $region34: #{gpt_forward.12} parent=31 // pred_check_branch
        %264 = sbr.rel (%p262) target = $region36
      $region35: #{gpt_forward.12} parent=31 // pred_region
        %vm265 = vcmask 7168
        %266 = vst.msk [vmem:[#allocation2] sm:$0xff] %vm265, -inf
        %267 = vst.msk [vmem:[#allocation3] sm:$0xff] %vm265, 0.0
        %vm268 = vcmask 64512
        %269 = vst.msk [vmem:[#allocation4] sm:$0xff] %vm268, 0.0
      $region36: #{gpt_forward.12} parent=31 // pred_fallthru
        _
      %s270 = smul.u32 %s20, 8
      %s271 = smul.u32 %s21, 8
      %s272 = sadd.s32 %s270, 7
      %p273 = scmp.le.s32.totalorder %s271, %s272
      // Predicated region
      $region37: #{gpt_forward.12} parent=31 // pred_check
        %p274 = pneg %p273
      $region38: #{gpt_forward.12} parent=31 // pred_check_branch
        %276 = sbr.rel (%p274) target = $region40
      $region39: #{gpt_forward.12} parent=31 // pred_region
        %v277 = vld [vmem:[%s238] sm:$0xf]
        %v278 = vunpack.c.l.bf16 %v277
        %v279 = vmul.f32 %v278, 0.35351563
        %v280 = vpack.c.bf16 %v279, %v279
        %v281 = vld [vmem:[%s245] sm:$0xf]
        %vm282 = vcmask 64512
        %v284 = vsel %vm282, %v280, 0
        %v287 = vsel %vm282, %v281, 0
        %289 = vmatpush.bf16.xpose.msra.mxu0 0
        %290 = vmatpush.bf16.xpose.msra.mxu0 0
        %291 = vmatpush.bf16.xpose.msra.mxu0 0
        %292 = vmatpush.bf16.xpose.msra.mxu0 0
        %293 = vmatpush.bf16.xpose.msra.mxu0 0
        %294 = vmatpush.bf16.xpose.msra.mxu0 0
        %295 = vmatpush.bf16.xpose.msra.mxu0 0
        %296 = vmatpush.bf16.xpose.msra.mxu0 %v287
        %297 = vmatmul.bf16.gmra.mxu0 %v284
        %v298 = vpop.f32.mrf.mxu0
        %v299 = vadd.f32 0.0, %v298
        %v300 = vpop.f32.mrf.mxu0
        %301 = vdwg.mxu0
        %v302 = vlaneseq
        %v303 = vshrl.u32 %v302, 7
        %v304 = vstv %s270
        %v305 = vadd.s32 %v304, %v303
        %v306 = vlaneseq
        %v307 = vand.u32 %v306, 127
        %v308 = vstv %s271
        %v309 = vadd.s32 %v308, %v307
        %vm310 = vcmp.le.s32.totalorder %v309, %v305
        %v311 = vsel %vm310, %v299, -1e+30
        %v312 = vld [vmem:[#allocation2] sm:$0xff]
        %v313 = vsel %vm282, %v311, -inf
        %314 = vmax.xlane.f32.xlu0 %v313
        %v315 = vpop.xlane.xlu0 %314
        %v316 = vmax.f32 %v312, %v315
        %v317 = vsub.f32 %v312, %v316
        %v318 = vmul.f32 %v317, 1.442695
        %v319 = vpow.pop %v318
        %321 = vset.pattern.permute.xlu0 0
        %322 = vperm.xlu0 %321, %v316
        %v323 = vpop.permute.xlu0 %322
        %v325 = vsub.f32 %v311, %v323
        %v326 = vmul.f32 %v325, 1.442695
        %v327 = vpow.pop %v326
        %v328 = vld [vmem:[#allocation3] sm:$0xff]
        %v329 = vmul.f32 %v319, %v328
        %v330 = vsel %vm282, %v327, 0.0
        %331 = vadd.xlane.f32.xlu0 %v330
        %v332 = vpop.xlane.xlu0 %331
        %v333 = vadd.f32 %v329, %v332
        %vm334 = vcmask 7168
        %335 = vst.msk [vmem:[#allocation3] sm:$0xff] %vm334, %v333
        %v336 = vld [vmem:[#allocation4] sm:$0xff]
        %338 = vset.pattern.permute.xlu0 0
        %339 = vperm.xlu0 %338, %v319
        %v340 = vpop.permute.xlu0 %339
        %v342 = vmul.f32 %v340, %v336
        %v343 = vpack.c.bf16 %v327, %v327
        %v344 = vld [vmem:[%s252] sm:$0xf]
        %v346 = vsel %vm282, %v343, 0
        %vm348 = vcmask 1043456
        %v350 = vsel %vm348, %v344, 0
        %352 = vmatpush.bf16.msra.mxu0 0
        %353 = vmatpush.bf16.msra.mxu0 0
        %354 = vmatpush.bf16.msra.mxu0 0
        %355 = vmatpush.bf16.msra.mxu0 0
        %356 = vmatpush.bf16.msra.mxu0 0
        %357 = vmatpush.bf16.msra.mxu0 0
        %358 = vmatpush.bf16.msra.mxu0 0
        %359 = vmatpush.bf16.msra.mxu0 %v350
        %360 = vmatmul.bf16.gmra.mxu0 %v346
        %v361 = vpop.f32.mrf.mxu0
        %v362 = vadd.f32 0.0, %v361
        %v363 = vpop.f32.mrf.mxu0
        %364 = vdwg.mxu0
        %v365 = vadd.f32 %v342, %v362
        %366 = vst.msk [vmem:[#allocation4] sm:$0xff] %vm282, %v365
        %367 = vst.msk [vmem:[#allocation2] sm:$0xff] %vm334, %v316
      $region40: #{gpt_forward.12} parent=31 // pred_fallthru
        _
      // Predicated region
      $region41: #{gpt_forward.12} parent=31 // pred_check
        %p368 = pneg %p261
      $region42: #{gpt_forward.12} parent=31 // pred_check_branch
        %370 = sbr.rel (%p368) target = $region44
      $region43: #{gpt_forward.12} parent=31 // pred_region
        %v371 = vld [vmem:[#allocation3] sm:$0xff]
        %v372 = vrcp.pop %v371
        %v373 = vld [vmem:[#allocation4] sm:$0xff]
        %375 = vset.pattern.permute.xlu0 0
        %376 = vperm.xlu0 %375, %v372
        %v377 = vpop.permute.xlu0 %376
        %v379 = vmul.f32 %v373, %v377
        %v380 = vpack.c.bf16 %v379, %v379
        %vm381 = vcmask 60416
        %382 = vst.msk [vmem:[%s259] sm:$0xf] %vm381, %v380
      $region44: #{gpt_forward.12} parent=31 // pred_fallthru
        _
      %p383 = scmp.lt.s32.totalorder %s19, 7
      %s384 = scalar_select %p383, %s19, 7
      %p385 = scmp.lt.s32.totalorder %s20, 0
      %s386 = scalar_select %p385, %s20, 0
      %s387 = sadd.s32 %s386, %s384
      %s388 = smul.addr %s387, 4
      %s389 = scalar_lea.vmem %s3, %s388
      // Predicated region
      $region45: #{gpt_forward.12} parent=31 // pred_check
        %p390 = pneg %p137
      $region46: #{gpt_forward.12} parent=31 // pred_check_branch
        %392 = sbr.rel (%p390) target = $region48
      $region47: #{gpt_forward.12} parent=31 // pred_region
        _
      $region48: #{gpt_forward.12} parent=31 // pred_fallthru
        _
    $region32: #{gpt_forward.12} parent=5 // pred_fallthru
      _
    %p393 = scmp.le.s32.totalorder 2, %s9
    // Predicated region
    $region49: #{gpt_forward.12} parent=5 // pred_check
      %p394 = pneg %p393
    $region50: #{gpt_forward.12} parent=5 // pred_check_branch
      %396 = sbr.rel (%p394) target = $region52
    $region51: #{gpt_forward.12} parent=5 // pred_region
      %s397 = ssub.s32 %s9, 2
      // Predicated region
      $region53: #{gpt_forward.12} parent=51 // pred_check
        %p398 = pneg %p143
      $region54: #{gpt_forward.12} parent=51 // pred_check_branch
        %400 = sbr.rel (%p398) target = $region56
      $region55: #{gpt_forward.12} parent=51 // pred_region
        %p401 = scmp.lt.s32.totalorder %s22, 7
        %s402 = scalar_select %p401, %s22, 7
        %p403 = scmp.lt.s32.totalorder %s23, 0
        %s404 = scalar_select %p403, %s23, 0
        %s405 = sadd.s32 %s404, %s402
        %s406 = smul.addr %s405, 4
        %s407 = scalar_lea.vmem %s3, %s406
      $region56: #{gpt_forward.12} parent=51 // pred_fallthru
        _
    $region52: #{gpt_forward.12} parent=5 // pred_fallthru
      _
  $region6: #{gpt_forward.12} parent=0 // loop_footer
    %s13 = sadd.s32 1, %s9
  $region7: #{gpt_forward.12} parent=0 // loop_footer_branch
    %8 = sbr.rel target = $region3
  $region8: #{gpt_forward.12} parent=0 // loop_exit
    _

// kernel: gpt_forward.13
$region0: #{gpt_forward.13}
  #allocation0 [shape = 'u32[]', space=smem, size = 0x4, offset = 0x4, fixed_abs, tag = 'smem constant byte address 0x4 - core index']
  #allocation1 [shape = 'u32[72,128]{1,0:T(1,128)}', space=vmem, size = 0x9000, scoped, tag = 'internal scratch']
  #allocation2 [shape = 'f32[16,32]{1,0:T(8,128)}', space=vmem, size = 0x2000, scoped, tag = 'scratch operand']
  %s0 = inlined_call_operand.vmem [shape: bf16[16,32], index: 0, kind: input, shape index: {}]
  %s1 = inlined_call_operand.vmem [shape: bf16[32,32], index: 1, kind: input, shape index: {}]
  %s2 = inlined_call_operand.vmem [shape: f32[1,32], index: 2, kind: input, shape index: {}]
  %s3 = inlined_call_operand.vmem [shape: bf16[16,32], index: 3, kind: input, shape index: {}]
  %s4 = inlined_call_operand.vmem [shape: bf16[16,32], index: 4, kind: output, shape index: {}]
  %s5 = sld [smem:[#allocation0]]
  $region34: #{gpt_forward.13} parent=0
    _
  %s7 = ssub.s32 1, %s5
  %s8 = scalar_select 0, %s7, %s5
  // Predicated region
  $region2: #{gpt_forward.13} parent=0 // pred_check
    _
  $region3: #{gpt_forward.13} parent=0 // pred_check_branch
    %10 = sbr.rel (0) target = $region5
  $region4: #{gpt_forward.13} parent=0 // pred_region
    _
  $region5: #{gpt_forward.13} parent=0 // pred_fallthru
    _
  // Predicated region
  $region6: #{gpt_forward.13} parent=0 // pred_check
    _
  $region7: #{gpt_forward.13} parent=0 // pred_check_branch
    %12 = sbr.rel (0) target = $region9
  $region8: #{gpt_forward.13} parent=0 // pred_region
    _
  $region9: #{gpt_forward.13} parent=0 // pred_fallthru
    _
  // Predicated region
  $region10: #{gpt_forward.13} parent=0 // pred_check
    _
  $region11: #{gpt_forward.13} parent=0 // pred_check_branch
    %14 = sbr.rel (0) target = $region13
  $region12: #{gpt_forward.13} parent=0 // pred_region
    _
  $region13: #{gpt_forward.13} parent=0 // pred_fallthru
    _
  // Predicated region
  $region14: #{gpt_forward.13} parent=0 // pred_check
    _
  $region15: #{gpt_forward.13} parent=0 // pred_check_branch
    %16 = sbr.rel (0) target = $region17
  $region16: #{gpt_forward.13} parent=0 // pred_region
    _
  $region17: #{gpt_forward.13} parent=0 // pred_fallthru
    _
  %p18 = scmp.eq.s32.totalorder 0, 0
  // Predicated region
  $region18: #{gpt_forward.13} parent=0 // pred_check
    %p19 = pneg %p18
  $region19: #{gpt_forward.13} parent=0 // pred_check_branch
    %21 = sbr.rel (%p19) target = $region21
  $region20: #{gpt_forward.13} parent=0 // pred_region
    %vm22 = vcmask 261120
    %23 = vst.msk [vmem:[#allocation2] sm:$0xff] %vm22, 0.0
    %24 = vst.msk [vmem:[#allocation2 + $0x8] sm:$0xff] %vm22, 0.0
  $region21: #{gpt_forward.13} parent=0 // pred_fallthru
    _
  %v25 = vld [vmem:[%s0] sm:$0xf]
  %v26 = vld [vmem:[%s0 + $0x4] sm:$0xf]
  %v27 = vld [vmem:[#allocation2] sm:$0xff]
  %v28 = vld [vmem:[#allocation2 + $0x8] sm:$0xff]
  %v29 = vld [vmem:[%s1] sm:$0xf]
  %v30 = vld [vmem:[%s1 + $0x4] sm:$0xf]
  %v31 = vld [vmem:[%s1 + $0x8] sm:$0xf]
  %v32 = vld [vmem:[%s1 + $0xc] sm:$0xf]
  %v35 = vunpack.c.l.b16 %v25
  %v36 = vunpack.c.l.b16 %v26
  %v37 = vpack.c.b16 %v36, %v35
  %v42 = vunpack.c.l.b16 %v29
  %v43 = vunpack.c.l.b16 %v30
  %v44 = vunpack.c.l.b16 %v31
  %v45 = vunpack.c.l.b16 %v32
  %v46 = vpack.c.b16 %v43, %v42
  %v47 = vpack.c.b16 %v45, %v44
  %vm50 = vcmask 261120
  %v52 = vsel %vm50, %v37, 0
  %54 = vmatpush.bf16.msra.mxu0 0
  %55 = vmatpush.bf16.msra.mxu0 0
  %56 = vmatpush.bf16.msra.mxu0 0
  %57 = vmatpush.bf16.msra.mxu0 0
  %58 = vmatpush.bf16.msra.mxu0 0
  %59 = vmatpush.bf16.msra.mxu0 0
  %60 = vmatpush.bf16.msra.mxu0 %v47
  %61 = vmatpush.bf16.msra.mxu0 %v46
  %62 = vmatmul.bf16.gmra.mxu0 %v52
  %v63 = vpop.f32.mrf.mxu0
  %v64 = vadd.f32 0.0, %v63
  %v65 = vpop.f32.mrf.mxu0
  %v66 = vadd.f32 0.0, %v65
  %67 = vdwg.mxu0
  %v68 = vadd.f32 %v27, %v64
  %v69 = vadd.f32 %v28, %v66
  %70 = vst.msk [vmem:[#allocation2] sm:$0xff] %vm50, %v68
  %71 = vst.msk [vmem:[#allocation2 + $0x8] sm:$0xff] %vm50, %v69
  // Predicated region
  $region22: #{gpt_forward.13} parent=0 // pred_check
    %p72 = pneg %p18
  $region23: #{gpt_forward.13} parent=0 // pred_check_branch
    %74 = sbr.rel (%p72) target = $region25
  $region24: #{gpt_forward.13} parent=0 // pred_region
    %v75 = vld [vmem:[#allocation2] sm:$0xff]
    %v76 = vld [vmem:[#allocation2 + $0x8] sm:$0xff]
    %v77 = vld [vmem:[%s2] sm:$0x1]
    %v79 = vperm.slane %v77, 0
    %v81 = vadd.f32 %v75, %v79
    %v82 = vadd.f32 %v76, %v79
    %v83 = vld [vmem:[%s3] sm:$0xf]
    %v84 = vld [vmem:[%s3 + $0x4] sm:$0xf]
    %v85 = vunpack.c.l.bf16 %v83
    %v86 = vunpack.c.l.bf16 %v84
    %v87 = vadd.f32 %v81, %v85
    %v88 = vadd.f32 %v82, %v86
    %v89 = vpack.c.bf16 %v87, %v87
    %v90 = vpack.c.bf16 %v88, %v88
    %vm91 = vcmask 257024
    %92 = vst.msk [vmem:[%s4] sm:$0xf] %vm91, %v89
    %93 = vst.msk [vmem:[%s4 + $0x4] sm:$0xf] %vm91, %v90
  $region25: #{gpt_forward.13} parent=0 // pred_fallthru
    _
  // Predicated region
  $region26: #{gpt_forward.13} parent=0 // pred_check
    _
  $region27: #{gpt_forward.13} parent=0 // pred_check_branch
    %95 = sbr.rel (0) target = $region29
  $region28: #{gpt_forward.13} parent=0 // pred_region
    _
  $region29: #{gpt_forward.13} parent=0 // pred_fallthru
    _
  // Predicated region
  $region30: #{gpt_forward.13} parent=0 // pred_check
    _
  $region31: #{gpt_forward.13} parent=0 // pred_check_branch
    %97 = sbr.rel (0) target = $region33
  $region32: #{gpt_forward.13} parent=0 // pred_region
    _
  $region33: #{gpt_forward.13} parent=0 // pred_fallthru
    _

// kernel: gpt_forward.14
$region0: #{gpt_forward.14}
  #allocation0 [shape = 'u32[]', space=smem, size = 0x4, offset = 0x4, fixed_abs, tag = 'smem constant byte address 0x4 - core index']
  #allocation1 [shape = 'u32[72,128]{1,0:T(1,128)}', space=vmem, size = 0x9000, scoped, tag = 'internal scratch']
  #allocation2 [shape = 'f32[16,128]{1,0:T(8,128)}', space=vmem, size = 0x2000, scoped, tag = 'scratch operand']
  %s0 = inlined_call_operand.vmem [shape: bf16[16,32], index: 0, kind: input, shape index: {}]
  %s1 = inlined_call_operand.vmem [shape: bf16[32,128], index: 1, kind: input, shape index: {}]
  %s2 = inlined_call_operand.vmem [shape: f32[1,32], index: 2, kind: input, shape index: {}]
  %s3 = inlined_call_operand.vmem [shape: f32[1,32], index: 3, kind: input, shape index: {}]
  %s4 = inlined_call_operand.vmem [shape: f32[1,128], index: 4, kind: input, shape index: {}]
  %s5 = inlined_call_operand.vmem [shape: bf16[16,128], index: 5, kind: output, shape index: {}]
  %s6 = sld [smem:[#allocation0]]
  $region38: #{gpt_forward.14} parent=0
    _
  %s8 = ssub.s32 1, %s6
  %s9 = scalar_select 0, %s8, %s6
  // Predicated region
  $region2: #{gpt_forward.14} parent=0 // pred_check
    _
  $region3: #{gpt_forward.14} parent=0 // pred_check_branch
    %11 = sbr.rel (0) target = $region5
  $region4: #{gpt_forward.14} parent=0 // pred_region
    _
  $region5: #{gpt_forward.14} parent=0 // pred_fallthru
    _
  // Predicated region
  $region6: #{gpt_forward.14} parent=0 // pred_check
    _
  $region7: #{gpt_forward.14} parent=0 // pred_check_branch
    %13 = sbr.rel (0) target = $region9
  $region8: #{gpt_forward.14} parent=0 // pred_region
    _
  $region9: #{gpt_forward.14} parent=0 // pred_fallthru
    _
  // Predicated region
  $region10: #{gpt_forward.14} parent=0 // pred_check
    _
  $region11: #{gpt_forward.14} parent=0 // pred_check_branch
    %15 = sbr.rel (0) target = $region13
  $region12: #{gpt_forward.14} parent=0 // pred_region
    _
  $region13: #{gpt_forward.14} parent=0 // pred_fallthru
    _
  // Predicated region
  $region14: #{gpt_forward.14} parent=0 // pred_check
    _
  $region15: #{gpt_forward.14} parent=0 // pred_check_branch
    %17 = sbr.rel (0) target = $region17
  $region16: #{gpt_forward.14} parent=0 // pred_region
    _
  $region17: #{gpt_forward.14} parent=0 // pred_fallthru
    _
  // Predicated region
  $region18: #{gpt_forward.14} parent=0 // pred_check
    _
  $region19: #{gpt_forward.14} parent=0 // pred_check_branch
    %19 = sbr.rel (0) target = $region21
  $region20: #{gpt_forward.14} parent=0 // pred_region
    _
  $region21: #{gpt_forward.14} parent=0 // pred_fallthru
    _
  %p21 = scmp.eq.s32.totalorder 0, 0
  // Predicated region
  $region22: #{gpt_forward.14} parent=0 // pred_check
    %p22 = pneg %p21
  $region23: #{gpt_forward.14} parent=0 // pred_check_branch
    %24 = sbr.rel (%p22) target = $region25
  $region24: #{gpt_forward.14} parent=0 // pred_region
    %25 = vst [vmem:[#allocation2] sm:$0xff] 0.0
    %26 = vst [vmem:[#allocation2 + $0x8] sm:$0xff] 0.0
  $region25: #{gpt_forward.14} parent=0 // pred_fallthru
    _
  %v27 = vld [vmem:[%s0] sm:$0xf]
  %v28 = vld [vmem:[%s0 + $0x4] sm:$0xf]
  %v29 = vunpack.c.l.bf16 %v27
  %v30 = vunpack.c.l.bf16 %v28
  %vm31 = vcmask 261120
  %v32 = vsel %vm31, %v29, 0.0
  %33 = vadd.xlane.f32.xlu0 %v32
  %v34 = vpop.xlane.xlu0 %33
  %v35 = vsel %vm31, %v30, 0.0
  %36 = vadd.xlane.f32.xlu0 %v35
  %v37 = vpop.xlane.xlu0 %36
  %v38 = vrcp.pop 32.0
  %v39 = vmul.f32 32.0, %v38
  %v40 = vsub.f32 1.0, %v39
  %v41 = vmul.f32 %v38, %v40
  %v42 = vadd.f32 %v38, %v41
  %vm43 = vweird.f32 %v38
  %v44 = vsel %vm43, %v38, %v42
  %v45 = vmul.f32 %v34, %v44
  %v46 = vmul.f32 %v37, %v44
  %v47 = vsub.f32 %v29, %v45
  %v48 = vsub.f32 %v30, %v46
  %v49 = vmul.f32 %v47, %v47
  %v50 = vmul.f32 %v48, %v48
  %v51 = vsel %vm31, %v49, 0.0
  %52 = vadd.xlane.f32.xlu0 %v51
  %v53 = vpop.xlane.xlu0 %52
  %v54 = vsel %vm31, %v50, 0.0
  %55 = vadd.xlane.f32.xlu0 %v54
  %v56 = vpop.xlane.xlu0 %55
  %v57 = vmul.f32 %v53, %v44
  %v58 = vmul.f32 %v56, %v44
  %v59 = vadd.f32 %v57, 1e-05
  %v60 = vadd.f32 %v58, 1e-05
  %v61 = vrsqrt.pop %v59
  %v62 = vmul.f32 %v61, %v59
  %v63 = vmul.f32 %v62, %v61
  %v64 = vmul.f32 0.5, %v63
  %v65 = vsub.f32 1.5, %v64
  %v66 = vmul.f32 %v61, %v65
  %vm67 = vweird.f32 %v59
  %vm68 = vweird.f32 %v61
  %vm69 = vmor %vm67, %vm68
  %v70 = vsel %vm69, %v61, %v66
  %v71 = vrsqrt.pop %v60
  %v72 = vmul.f32 %v71, %v60
  %v73 = vmul.f32 %v72, %v71
  %v74 = vmul.f32 0.5, %v73
  %v75 = vsub.f32 1.5, %v74
  %v76 = vmul.f32 %v71, %v75
  %vm77 = vweird.f32 %v60
  %vm78 = vweird.f32 %v71
  %vm79 = vmor %vm77, %vm78
  %v80 = vsel %vm79, %v71, %v76
  %v81 = vmul.f32 %v47, %v70
  %v82 = vmul.f32 %v48, %v80
  %v83 = vld [vmem:[%s2] sm:$0x1]
  %v85 = vperm.slane %v83, 0
  %v87 = vmul.f32 %v81, %v85
  %v88 = vmul.f32 %v82, %v85
  %v89 = vld [vmem:[%s3] sm:$0x1]
  %v91 = vperm.slane %v89, 0
  %v93 = vadd.f32 %v87, %v91
  %v94 = vadd.f32 %v88, %v91
  %v95 = vpack.c.bf16 %v94, %v93
  %v96 = vld [vmem:[#allocation2] sm:$0xff]
  %v97 = vld [vmem:[#allocation2 + $0x8] sm:$0xff]
  %v98 = vld [vmem:[%s1] sm:$0xf]
  %v99 = vld [vmem:[%s1 + $0x4] sm:$0xf]
  %v100 = vld [vmem:[%s1 + $0x8] sm:$0xf]
  %v101 = vld [vmem:[%s1 + $0xc] sm:$0xf]
  %v106 = vunpack.c.l.b16 %v98
  %v107 = vunpack.c.l.b16 %v99
  %v108 = vunpack.c.l.b16 %v100
  %v109 = vunpack.c.l.b16 %v101
  %v110 = vpack.c.b16 %v107, %v106
  %v111 = vpack.c.b16 %v109, %v108
  %v115 = vsel %vm31, %v95, 0
  %117 = vmatpush.bf16.msra.mxu0 0
  %118 = vmatpush.bf16.msra.mxu0 0
  %119 = vmatpush.bf16.msra.mxu0 0
  %120 = vmatpush.bf16.msra.mxu0 0
  %121 = vmatpush.bf16.msra.mxu0 0
  %122 = vmatpush.bf16.msra.mxu0 0
  %123 = vmatpush.bf16.msra.mxu0 %v111
  %124 = vmatpush.bf16.msra.mxu0 %v110
  %125 = vmatmul.bf16.gmra.mxu0 %v115
  %v126 = vpop.f32.mrf.mxu0
  %v127 = vadd.f32 0.0, %v126
  %v128 = vpop.f32.mrf.mxu0
  %v129 = vadd.f32 0.0, %v128
  %130 = vdwg.mxu0
  %v131 = vadd.f32 %v96, %v127
  %v132 = vadd.f32 %v97, %v129
  %133 = vst [vmem:[#allocation2] sm:$0xff] %v131
  %134 = vst [vmem:[#allocation2 + $0x8] sm:$0xff] %v132
  // Predicated region
  $region26: #{gpt_forward.14} parent=0 // pred_check
    %p135 = pneg %p21
  $region27: #{gpt_forward.14} parent=0 // pred_check_branch
    %137 = sbr.rel (%p135) target = $region29
  $region28: #{gpt_forward.14} parent=0 // pred_region
    %v138 = vld [vmem:[#allocation2] sm:$0xff]
    %v139 = vld [vmem:[#allocation2 + $0x8] sm:$0xff]
    %v140 = vld [vmem:[%s4] sm:$0x1]
    %v142 = vperm.slane %v140, 0
    %v144 = vadd.f32 %v138, %v142
    %v145 = vadd.f32 %v139, %v142
    %v146 = vmul.f32 %v144, 0.5
    %v147 = vmul.f32 %v145, 0.5
    %v148 = vmul.f32 %v144, 0.70710677
    %v149 = vmul.f32 %v145, 0.70710677
    %v150 = vmul.f32 %v148, %v148
    %v151 = vmin.f32 16.0, %v150
    %v152 = vmul.f32 %v151, 2.1237322e-06
    %v153 = vadd.f32 %v152, 0.00028619796
    %v154 = vmul.f32 %v151, %v153
    %v155 = vadd.f32 %v154, 0.0036580483
    %v156 = vmul.f32 %v151, %v155
    %v157 = vadd.f32 %v156, 0.05243302
    %v158 = vmul.f32 %v151, %v157
    %v159 = vadd.f32 %v158, 0.18741608
    %v160 = vmul.f32 %v151, %v159
    %v161 = vadd.f32 %v160, 1.1283791
    %v162 = vmul.f32 %v148, %v161
    %v163 = vmul.f32 %v151, 3.8918573e-05
    %v164 = vadd.f32 %v163, 0.001143296
    %v165 = vmul.f32 %v151, %v164
    %v166 = vadd.f32 %v165, 0.014752088
    %v167 = vmul.f32 %v151, %v166
    %v168 = vadd.f32 %v167, 0.112945676
    %v169 = vmul.f32 %v151, %v168
    %v170 = vadd.f32 %v169, 0.4994258
    %v171 = vmul.f32 %v151, %v170
    %v172 = vadd.f32 %v171, 1.0
    %v173 = vrcp.pop %v172
    %v174 = vmul.f32 %v172, %v173
    %v175 = vsub.f32 1.0, %v174
    %v176 = vmul.f32 %v173, %v175
    %v177 = vadd.f32 %v173, %v176
    %vm178 = vweird.f32 %v172
    %vm179 = vweird.f32 %v173
    %vm180 = vmor %vm178, %vm179
    %v181 = vsel %vm180, %v173, %v177
    %v182 = vand.u32 2147483647, %v172
    %vm183 = vcmp.eq.f32.partialorder %v182, 8.507059e+37
    %v184 = vand.u32 %v172, 2147483648
    %v185 = vor.u32 1.1754944e-38, %v184
    %v186 = vsel %vm183, %v185, %v181
    %v187 = vmul.f32 %v162, %v186
    %v188 = vmin.f32 %v187, 1.0
    %v189 = vmax.f32 %v188, -1.0
    %v190 = vmul.f32 %v149, %v149
    %v191 = vmin.f32 16.0, %v190
    %v192 = vmul.f32 %v191, 2.1237322e-06
    %v193 = vadd.f32 %v192, 0.00028619796
    %v194 = vmul.f32 %v191, %v193
    %v195 = vadd.f32 %v194, 0.0036580483
    %v196 = vmul.f32 %v191, %v195
    %v197 = vadd.f32 %v196, 0.05243302
    %v198 = vmul.f32 %v191, %v197
    %v199 = vadd.f32 %v198, 0.18741608
    %v200 = vmul.f32 %v191, %v199
    %v201 = vadd.f32 %v200, 1.1283791
    %v202 = vmul.f32 %v149, %v201
    %v203 = vmul.f32 %v191, 3.8918573e-05
    %v204 = vadd.f32 %v203, 0.001143296
    %v205 = vmul.f32 %v191, %v204
    %v206 = vadd.f32 %v205, 0.014752088
    %v207 = vmul.f32 %v191, %v206
    %v208 = vadd.f32 %v207, 0.112945676
    %v209 = vmul.f32 %v191, %v208
    %v210 = vadd.f32 %v209, 0.4994258
    %v211 = vmul.f32 %v191, %v210
    %v212 = vadd.f32 %v211, 1.0
    %v213 = vrcp.pop %v212
    %v214 = vmul.f32 %v212, %v213
    %v215 = vsub.f32 1.0, %v214
    %v216 = vmul.f32 %v213, %v215
    %v217 = vadd.f32 %v213, %v216
    %vm218 = vweird.f32 %v212
    %vm219 = vweird.f32 %v213
    %vm220 = vmor %vm218, %vm219
    %v221 = vsel %vm220, %v213, %v217
    %v222 = vand.u32 2147483647, %v212
    %vm223 = vcmp.eq.f32.partialorder %v222, 8.507059e+37
    %v224 = vand.u32 %v212, 2147483648
    %v225 = vor.u32 1.1754944e-38, %v224
    %v226 = vsel %vm223, %v225, %v221
    %v227 = vmul.f32 %v202, %v226
    %v228 = vmin.f32 %v227, 1.0
    %v229 = vmax.f32 %v228, -1.0
    %v230 = vadd.f32 %v189, 1.0
    %v231 = vadd.f32 %v229, 1.0
    %v232 = vmul.f32 %v146, %v230
    %v233 = vmul.f32 %v147, %v231
    %v234 = vpack.c.bf16 %v232, %v232
    %v235 = vpack.c.bf16 %v233, %v233
    %236 = vst [vmem:[%s5] sm:$0xf] %v234
    %237 = vst [vmem:[%s5 + $0x4] sm:$0xf] %v235
  $region29: #{gpt_forward.14} parent=0 // pred_fallthru
    _
  // Predicated region
  $region30: #{gpt_forward.14} parent=0 // pred_check
    _
  $region31: #{gpt_forward.14} parent=0 // pred_check_branch
    %239 = sbr.rel (0) target = $region33
  $region32: #{gpt_forward.14} parent=0 // pred_region
    _
  $region33: #{gpt_forward.14} parent=0 // pred_fallthru
    _
  // Predicated region
  $region34: #{gpt_forward.14} parent=0 // pred_check
    _
  $region35: #{gpt_forward.14} parent=0 // pred_check_branch
    %241 = sbr.rel (0) target = $region37
  $region36: #{gpt_forward.14} parent=0 // pred_region
    _
  $region37: #{gpt_forward.14} parent=0 // pred_fallthru
    _

// kernel: gpt_forward.15
$region0: #{gpt_forward.15}
  #allocation0 [shape = 'u32[]', space=smem, size = 0x4, offset = 0x4, fixed_abs, tag = 'smem constant byte address 0x4 - core index']
  #allocation1 [shape = 'u32[72,128]{1,0:T(1,128)}', space=vmem, size = 0x9000, scoped, tag = 'internal scratch']
  #allocation2 [shape = 'f32[16,32]{1,0:T(8,128)}', space=vmem, size = 0x2000, scoped, tag = 'scratch operand']
  %s0 = inlined_call_operand.vmem [shape: bf16[16,128], index: 0, kind: input, shape index: {}]
  %s1 = inlined_call_operand.vmem [shape: bf16[128,32], index: 1, kind: input, shape index: {}]
  %s2 = inlined_call_operand.vmem [shape: f32[1,32], index: 2, kind: input, shape index: {}]
  %s3 = inlined_call_operand.vmem [shape: bf16[16,32], index: 3, kind: input, shape index: {}]
  %s4 = inlined_call_operand.vmem [shape: bf16[16,32], index: 4, kind: output, shape index: {}]
  %s5 = sld [smem:[#allocation0]]
  $region34: #{gpt_forward.15} parent=0
    _
  %s7 = ssub.s32 1, %s5
  %s8 = scalar_select 0, %s7, %s5
  // Predicated region
  $region2: #{gpt_forward.15} parent=0 // pred_check
    _
  $region3: #{gpt_forward.15} parent=0 // pred_check_branch
    %10 = sbr.rel (0) target = $region5
  $region4: #{gpt_forward.15} parent=0 // pred_region
    _
  $region5: #{gpt_forward.15} parent=0 // pred_fallthru
    _
  // Predicated region
  $region6: #{gpt_forward.15} parent=0 // pred_check
    _
  $region7: #{gpt_forward.15} parent=0 // pred_check_branch
    %12 = sbr.rel (0) target = $region9
  $region8: #{gpt_forward.15} parent=0 // pred_region
    _
  $region9: #{gpt_forward.15} parent=0 // pred_fallthru
    _
  // Predicated region
  $region10: #{gpt_forward.15} parent=0 // pred_check
    _
  $region11: #{gpt_forward.15} parent=0 // pred_check_branch
    %14 = sbr.rel (0) target = $region13
  $region12: #{gpt_forward.15} parent=0 // pred_region
    _
  $region13: #{gpt_forward.15} parent=0 // pred_fallthru
    _
  // Predicated region
  $region14: #{gpt_forward.15} parent=0 // pred_check
    _
  $region15: #{gpt_forward.15} parent=0 // pred_check_branch
    %16 = sbr.rel (0) target = $region17
  $region16: #{gpt_forward.15} parent=0 // pred_region
    _
  $region17: #{gpt_forward.15} parent=0 // pred_fallthru
    _
  %p17 = scmp.eq.s32.totalorder 0, 0
  // Predicated region
  $region18: #{gpt_forward.15} parent=0 // pred_check
    %p18 = pneg %p17
  $region19: #{gpt_forward.15} parent=0 // pred_check_branch
    %20 = sbr.rel (%p18) target = $region21
  $region20: #{gpt_forward.15} parent=0 // pred_region
    %vm21 = vcmask 261120
    %22 = vst.msk [vmem:[#allocation2] sm:$0xff] %vm21, 0.0
    %23 = vst.msk [vmem:[#allocation2 + $0x8] sm:$0xff] %vm21, 0.0
  $region21: #{gpt_forward.15} parent=0 // pred_fallthru
    _
  %v24 = vld [vmem:[%s0] sm:$0xf]
  %v25 = vld [vmem:[%s0 + $0x4] sm:$0xf]
  %v26 = vld [vmem:[#allocation2] sm:$0xff]
  %v27 = vld [vmem:[#allocation2 + $0x8] sm:$0xff]
  %v28 = vld [vmem:[%s1] sm:$0xf]
  %v29 = vld [vmem:[%s1 + $0x4] sm:$0xf]
  %v30 = vld [vmem:[%s1 + $0x8] sm:$0xf]
  %v31 = vld [vmem:[%s1 + $0xc] sm:$0xf]
  %v32 = vld [vmem:[%s1 + $0x10] sm:$0xf]
  %v33 = vld [vmem:[%s1 + $0x14] sm:$0xf]
  %v34 = vld [vmem:[%s1 + $0x18] sm:$0xf]
  %v35 = vld [vmem:[%s1 + $0x1c] sm:$0xf]
  %v36 = vld [vmem:[%s1 + $0x20] sm:$0xf]
  %v37 = vld [vmem:[%s1 + $0x24] sm:$0xf]
  %v38 = vld [vmem:[%s1 + $0x28] sm:$0xf]
  %v39 = vld [vmem:[%s1 + $0x2c] sm:$0xf]
  %v40 = vld [vmem:[%s1 + $0x30] sm:$0xf]
  %v41 = vld [vmem:[%s1 + $0x34] sm:$0xf]
  %v42 = vld [vmem:[%s1 + $0x38] sm:$0xf]
  %v43 = vld [vmem:[%s1 + $0x3c] sm:$0xf]
  %v46 = vunpack.c.l.b16 %v24
  %v47 = vunpack.c.l.b16 %v25
  %v48 = vpack.c.b16 %v47, %v46
  %v66 = vunpack.c.l.b16 %v28
  %v67 = vunpack.c.l.b16 %v29
  %v68 = vunpack.c.l.b16 %v30
  %v69 = vunpack.c.l.b16 %v31
  %v70 = vunpack.c.l.b16 %v32
  %v71 = vunpack.c.l.b16 %v33
  %v72 = vunpack.c.l.b16 %v34
  %v73 = vunpack.c.l.b16 %v35
  %v74 = vunpack.c.l.b16 %v36
  %v75 = vunpack.c.l.b16 %v37
  %v76 = vunpack.c.l.b16 %v38
  %v77 = vunpack.c.l.b16 %v39
  %v78 = vunpack.c.l.b16 %v40
  %v79 = vunpack.c.l.b16 %v41
  %v80 = vunpack.c.l.b16 %v42
  %v81 = vunpack.c.l.b16 %v43
  %v82 = vpack.c.b16 %v67, %v66
  %v83 = vpack.c.b16 %v69, %v68
  %v84 = vpack.c.b16 %v71, %v70
  %v85 = vpack.c.b16 %v73, %v72
  %v86 = vpack.c.b16 %v75, %v74
  %v87 = vpack.c.b16 %v77, %v76
  %v88 = vpack.c.b16 %v79, %v78
  %v89 = vpack.c.b16 %v81, %v80
  %98 = vmatpush.bf16.msra.mxu0 %v89
  %99 = vmatpush.bf16.msra.mxu0 %v88
  %100 = vmatpush.bf16.msra.mxu0 %v87
  %101 = vmatpush.bf16.msra.mxu0 %v86
  %102 = vmatpush.bf16.msra.mxu0 %v85
  %103 = vmatpush.bf16.msra.mxu0 %v84
  %104 = vmatpush.bf16.msra.mxu0 %v83
  %105 = vmatpush.bf16.msra.mxu0 %v82
  %106 = vmatmul.bf16.gmra.mxu0 %v48
  %v107 = vpop.f32.mrf.mxu0
  %v108 = vadd.f32 0.0, %v107
  %v109 = vpop.f32.mrf.mxu0
  %v110 = vadd.f32 0.0, %v109
  %111 = vdwg.mxu0
  %v112 = vadd.f32 %v26, %v108
  %v113 = vadd.f32 %v27, %v110
  %vm114 = vcmask 261120
  %115 = vst.msk [vmem:[#allocation2] sm:$0xff] %vm114, %v112
  %116 = vst.msk [vmem:[#allocation2 + $0x8] sm:$0xff] %vm114, %v113
  // Predicated region
  $region22: #{gpt_forward.15} parent=0 // pred_check
    %p117 = pneg %p17
  $region23: #{gpt_forward.15} parent=0 // pred_check_branch
    %119 = sbr.rel (%p117) target = $region25
  $region24: #{gpt_forward.15} parent=0 // pred_region
    %v120 = vld [vmem:[#allocation2] sm:$0xff]
    %v121 = vld [vmem:[#allocation2 + $0x8] sm:$0xff]
    %v122 = vld [vmem:[%s2] sm:$0x1]
    %v124 = vperm.slane %v122, 0
    %v126 = vadd.f32 %v120, %v124
    %v127 = vadd.f32 %v121, %v124
    %v128 = vld [vmem:[%s3] sm:$0xf]
    %v129 = vld [vmem:[%s3 + $0x4] sm:$0xf]
    %v130 = vunpack.c.l.bf16 %v128
    %v131 = vunpack.c.l.bf16 %v129
    %v132 = vadd.f32 %v126, %v130
    %v133 = vadd.f32 %v127, %v131
    %v134 = vpack.c.bf16 %v132, %v132
    %v135 = vpack.c.bf16 %v133, %v133
    %vm136 = vcmask 257024
    %137 = vst.msk [vmem:[%s4] sm:$0xf] %vm136, %v134
    %138 = vst.msk [vmem:[%s4 + $0x4] sm:$0xf] %vm136, %v135
  $region25: #{gpt_forward.15} parent=0 // pred_fallthru
    _
  // Predicated region
  $region26: #{gpt_forward.15} parent=0 // pred_check
    _
  $region27: #{gpt_forward.15} parent=0 // pred_check_branch
    %140 = sbr.rel (0) target = $region29
  $region28: #{gpt_forward.15} parent=0 // pred_region
    _
  $region29: #{gpt_forward.15} parent=0 // pred_fallthru
    _
  // Predicated region
  $region30: #{gpt_forward.15} parent=0 // pred_check
    _
  $region31: #{gpt_forward.15} parent=0 // pred_check_branch
    %142 = sbr.rel (0) target = $region33
  $region32: #{gpt_forward.15} parent=0 // pred_region
    _
  $region33: #{gpt_forward.15} parent=0 // pred_fallthru
    _

// kernel: gpt_forward.21
$region0: #{gpt_forward.21}
  #allocation0 [shape = 'u32[]', space=smem, size = 0x4, offset = 0x4, fixed_abs, tag = 'smem constant byte address 0x4 - core index']
  #allocation1 [shape = 'u32[72,128]{1,0:T(1,128)}', space=vmem, size = 0x9000, scoped, tag = 'internal scratch']
  #allocation2 [shape = 'f32[16,256]{1,0:T(8,128)}', space=vmem, size = 0x4000, scoped, tag = 'scratch operand']
  %s0 = inlined_call_operand.vmem [shape: bf16[16,32], index: 0, kind: input, shape index: {}]
  %s1 = inlined_call_operand.vmem [shape: bf16[32,256], index: 1, kind: input, shape index: {}]
  %s2 = inlined_call_operand.vmem [shape: f32[1,32], index: 2, kind: input, shape index: {}]
  %s3 = inlined_call_operand.vmem [shape: f32[1,32], index: 3, kind: input, shape index: {}]
  %s4 = inlined_call_operand.hbm [shape: f32[16,256], index: 4, kind: output, shape index: {}]
  %s5 = sld [smem:[#allocation0]]
  $region34: #{gpt_forward.21} parent=0
    _
  %s7 = ssub.s32 1, %s5
  %s8 = scalar_select 0, %s7, %s5
  $region1: #{gpt_forward.21} parent=0
    #allocation3 [shape = 'u8[16384]{0}', space=vmem, size = 0x4000, scoped, tag = 'output window, operand 0, single buffered']
    #allocation4 [shape = 's32[1]{0}', space=sflag, size = 0x4, scoped, tag = 'scoped memory for gpt_forward.21']
    %9 = vsyncpa [#allocation4], 0
    // Predicated region
    $region2: #{gpt_forward.21} parent=1 // pred_check
      _
    $region3: #{gpt_forward.21} parent=1 // pred_check_branch
      %11 = sbr.rel (0) target = $region5
    $region4: #{gpt_forward.21} parent=1 // pred_region
      _
    $region5: #{gpt_forward.21} parent=1 // pred_fallthru
      _
    // Predicated region
    $region6: #{gpt_forward.21} parent=1 // pred_check
      _
    $region7: #{gpt_forward.21} parent=1 // pred_check_branch
      %13 = sbr.rel (0) target = $region9
    $region8: #{gpt_forward.21} parent=1 // pred_region
      _
    $region9: #{gpt_forward.21} parent=1 // pred_fallthru
      _
    // Predicated region
    $region10: #{gpt_forward.21} parent=1 // pred_check
      _
    $region11: #{gpt_forward.21} parent=1 // pred_check_branch
      %15 = sbr.rel (0) target = $region13
    $region12: #{gpt_forward.21} parent=1 // pred_region
      _
    $region13: #{gpt_forward.21} parent=1 // pred_fallthru
      _
    // Predicated region
    $region14: #{gpt_forward.21} parent=1 // pred_check
      _
    $region15: #{gpt_forward.21} parent=1 // pred_check_branch
      %17 = sbr.rel (0) target = $region17
    $region16: #{gpt_forward.21} parent=1 // pred_region
      _
    $region17: #{gpt_forward.21} parent=1 // pred_fallthru
      _
    %p19 = scmp.eq.s32.totalorder 0, 0
    // Predicated region
    $region18: #{gpt_forward.21} parent=1 // pred_check
      %p20 = pneg %p19
    $region19: #{gpt_forward.21} parent=1 // pred_check_branch
      %22 = sbr.rel (%p20) target = $region21
    $region20: #{gpt_forward.21} parent=1 // pred_region
      %23 = vst [vmem:[#allocation2] sm:$0xff] 0.0
      %24 = vst [vmem:[#allocation2 + $0x8] sm:$0xff] 0.0
      %25 = vst [vmem:[#allocation2 + $0x10] sm:$0xff] 0.0
      %26 = vst [vmem:[#allocation2 + $0x18] sm:$0xff] 0.0
    $region21: #{gpt_forward.21} parent=1 // pred_fallthru
      _
    %v27 = vld [vmem:[%s0] sm:$0xf]
    %v28 = vld [vmem:[%s0 + $0x4] sm:$0xf]
    %v29 = vunpack.c.l.bf16 %v27
    %v30 = vunpack.c.l.bf16 %v28
    %vm31 = vcmask 261120
    %v32 = vsel %vm31, %v29, 0.0
    %33 = vadd.xlane.f32.xlu0 %v32
    %v34 = vpop.xlane.xlu0 %33
    %v35 = vsel %vm31, %v30, 0.0
    %36 = vadd.xlane.f32.xlu0 %v35
    %v37 = vpop.xlane.xlu0 %36
    %v38 = vrcp.pop 32.0
    %v39 = vmul.f32 32.0, %v38
    %v40 = vsub.f32 1.0, %v39
    %v41 = vmul.f32 %v38, %v40
    %v42 = vadd.f32 %v38, %v41
    %vm43 = vweird.f32 %v38
    %v44 = vsel %vm43, %v38, %v42
    %v45 = vmul.f32 %v34, %v44
    %v46 = vmul.f32 %v37, %v44
    %v47 = vsub.f32 %v29, %v45
    %v48 = vsub.f32 %v30, %v46
    %v49 = vmul.f32 %v47, %v47
    %v50 = vmul.f32 %v48, %v48
    %v51 = vsel %vm31, %v49, 0.0
    %52 = vadd.xlane.f32.xlu0 %v51
    %v53 = vpop.xlane.xlu0 %52
    %v54 = vsel %vm31, %v50, 0.0
    %55 = vadd.xlane.f32.xlu0 %v54
    %v56 = vpop.xlane.xlu0 %55
    %v57 = vmul.f32 %v53, %v44
    %v58 = vmul.f32 %v56, %v44
    %v59 = vadd.f32 %v57, 1e-05
    %v60 = vadd.f32 %v58, 1e-05
    %v61 = vrsqrt.pop %v59
    %v62 = vmul.f32 %v61, %v59
    %v63 = vmul.f32 %v62, %v61
    %v64 = vmul.f32 0.5, %v63
    %v65 = vsub.f32 1.5, %v64
    %v66 = vmul.f32 %v61, %v65
    %vm67 = vweird.f32 %v59
    %vm68 = vweird.f32 %v61
    %vm69 = vmor %vm67, %vm68
    %v70 = vsel %vm69, %v61, %v66
    %v71 = vrsqrt.pop %v60
    %v72 = vmul.f32 %v71, %v60
    %v73 = vmul.f32 %v72, %v71
    %v74 = vmul.f32 0.5, %v73
    %v75 = vsub.f32 1.5, %v74
    %v76 = vmul.f32 %v71, %v75
    %vm77 = vweird.f32 %v60
    %vm78 = vweird.f32 %v71
    %vm79 = vmor %vm77, %vm78
    %v80 = vsel %vm79, %v71, %v76
    %v81 = vmul.f32 %v47, %v70
    %v82 = vmul.f32 %v48, %v80
    %v83 = vld [vmem:[%s2] sm:$0x1]
    %v85 = vperm.slane %v83, 0
    %v87 = vmul.f32 %v81, %v85
    %v88 = vmul.f32 %v82, %v85
    %v89 = vld [vmem:[%s3] sm:$0x1]
    %v91 = vperm.slane %v89, 0
    %v93 = vadd.f32 %v87, %v91
    %v94 = vadd.f32 %v88, %v91
    %v95 = vpack.c.bf16 %v94, %v93
    %v96 = vld [vmem:[#allocation2] sm:$0xff]
    %v97 = vld [vmem:[#allocation2 + $0x8] sm:$0xff]
    %v98 = vld [vmem:[#allocation2 + $0x10] sm:$0xff]
    %v99 = vld [vmem:[#allocation2 + $0x18] sm:$0xff]
    %v100 = vld [vmem:[%s1] sm:$0xff]
    %v101 = vld [vmem:[%s1 + $0x8] sm:$0xff]
    %v102 = vld [vmem:[%s1 + $0x10] sm:$0xff]
    %v103 = vld [vmem:[%s1 + $0x18] sm:$0xff]
    %v108 = vunpack.c.l.b16 %v100
    %v109 = vunpack.c.h.b16 %v100
    %v110 = vunpack.c.l.b16 %v101
    %v111 = vunpack.c.h.b16 %v101
    %v112 = vunpack.c.l.b16 %v102
    %v113 = vunpack.c.h.b16 %v102
    %v114 = vunpack.c.l.b16 %v103
    %v115 = vunpack.c.h.b16 %v103
    %v116 = vpack.c.b16 %v110, %v108
    %v117 = vpack.c.b16 %v111, %v109
    %v118 = vpack.c.b16 %v114, %v112
    %v119 = vpack.c.b16 %v115, %v113
    %v125 = vsel %vm31, %v95, 0
    %127 = vmatpush.bf16.msra.mxu0 0
    %128 = vmatpush.bf16.msra.mxu0 0
    %129 = vmatpush.bf16.msra.mxu0 0
    %130 = vmatpush.bf16.msra.mxu0 0
    %131 = vmatpush.bf16.msra.mxu0 0
    %132 = vmatpush.bf16.msra.mxu0 0
    %133 = vmatpush.bf16.msra.mxu0 %v118
    %134 = vmatpush.bf16.msra.mxu0 %v116
    %135 = vmatmul.bf16.gmra.mxu0 %v125
    %v136 = vpop.f32.mrf.mxu0
    %v137 = vadd.f32 0.0, %v136
    %v138 = vpop.f32.mrf.mxu0
    %v139 = vadd.f32 0.0, %v138
    %140 = vdwg.mxu0
    %141 = vmatpush.bf16.msra.mxu0 0
    %142 = vmatpush.bf16.msra.mxu0 0
    %143 = vmatpush.bf16.msra.mxu0 0
    %144 = vmatpush.bf16.msra.mxu0 0
    %145 = vmatpush.bf16.msra.mxu0 0
    %146 = vmatpush.bf16.msra.mxu0 0
    %147 = vmatpush.bf16.msra.mxu0 %v119
    %148 = vmatpush.bf16.msra.mxu0 %v117
    %149 = vmatmul.bf16.gmra.mxu0 %v125
    %v150 = vpop.f32.mrf.mxu0
    %v151 = vadd.f32 0.0, %v150
    %v152 = vpop.f32.mrf.mxu0
    %v153 = vadd.f32 0.0, %v152
    %154 = vdwg.mxu0
    %v155 = vadd.f32 %v96, %v137
    %v156 = vadd.f32 %v97, %v151
    %v157 = vadd.f32 %v98, %v139
    %v158 = vadd.f32 %v99, %v153
    %159 = vst [vmem:[#allocation2] sm:$0xff] %v155
    %160 = vst [vmem:[#allocation2 + $0x8] sm:$0xff] %v156
    %161 = vst [vmem:[#allocation2 + $0x10] sm:$0xff] %v157
    %162 = vst [vmem:[#allocation2 + $0x18] sm:$0xff] %v158
    // Predicated region
    $region22: #{gpt_forward.21} parent=1 // pred_check
      %p163 = pneg %p19
    $region23: #{gpt_forward.21} parent=1 // pred_check_branch
      %165 = sbr.rel (%p163) target = $region25
    $region24: #{gpt_forward.21} parent=1 // pred_region
      %v166 = vld [vmem:[#allocation2] sm:$0xff]
      %v167 = vld [vmem:[#allocation2 + $0x8] sm:$0xff]
      %v168 = vld [vmem:[#allocation2 + $0x10] sm:$0xff]
      %v169 = vld [vmem:[#allocation2 + $0x18] sm:$0xff]
      %170 = vst [vmem:[#allocation3] sm:$0xff] %v166
      %171 = vst [vmem:[#allocation3 + $0x8] sm:$0xff] %v167
      %172 = vst [vmem:[#allocation3 + $0x10] sm:$0xff] %v168
      %173 = vst [vmem:[#allocation3 + $0x18] sm:$0xff] %v169
    $region25: #{gpt_forward.21} parent=1 // pred_fallthru
      _
    // Predicated region
    $region26: #{gpt_forward.21} parent=1 // pred_check
      _
    $region27: #{gpt_forward.21} parent=1 // pred_check_branch
      %175 = sbr.rel (0) target = $region29
    $region28: #{gpt_forward.21} parent=1 // pred_region
      %177 = vsyncadd [#allocation4], 0
      %s178 = sshll.u32 [#allocation3], 4
      %s179 = int_to_ptr.vmem [resolvable:$true] %s178
      %s180 = sshll.u32 %s4, 4
      %s181 = int_to_ptr.hbm [resolvable:$true] %s180
      %186 = dma.vmem_to_hbm [thread:$0]  %s179, 512, %s181, [#allocation4], 256, 256, 16
    $region29: #{gpt_forward.21} parent=1 // pred_fallthru
      _
    // Predicated region
    $region30: #{gpt_forward.21} parent=1 // pred_check
      _
    $region31: #{gpt_forward.21} parent=1 // pred_check_branch
      %188 = sbr.rel (0) target = $region33
    $region32: #{gpt_forward.21} parent=1 // pred_region
      %190 = dma.done [#allocation4], 512
    $region33: #{gpt_forward.21} parent=1 // pred_fallthru
      _
    %191 = vsyncpa [#allocation4], 1

</llo_original>
